<compile_context>
chip_gen: v7x
topology: tpu7x:2x2x1
jax: 0.10.0
libtpu: 0.0.40
codegen_flags: <defaults>
</compile_context>

<pallas_src>
import functools

import jax
import jax.numpy as jnp
import numpy as np
from jax import lax
from jax.experimental import pallas as pl
from jax.experimental.pallas import tpu as pltpu

_PAD = 128  # left margin of the conv scratch; keeps the activation store and
            # the matmul-feeding loads lane-aligned (only +/-dil lanes shift).


def _ublock_kernel(x_ref, fp_ref, fn_ref,
                   wm_ref, bm_ref, w1_ref, b1_ref, w2_ref, b2_ref,
                   out_ref, ha_ref, hb_ref, *, cin, t2, dil, bt):
    """One block of `bt` batch rows per grid step, channels-first layout.

    x_ref  : (bt, Cin,   T2)  bf16 upsampled input
    fp/fn  : (bt, 2*Cin, T2)  packed FiLM tensors ([scale; shift] on channels)
    w*     : (3, C_out, Cin)  bf16 per-tap conv weights, b*: (C_out, 1) f32
    out    : (bt, C_out, T2)
    ha/hb  : (Cin, T2 + 2*_PAD) bf16 scratch; activation at lanes [_PAD,_PAD+T2)
    """

    def lrelu(v):
        return jnp.where(v > 0, v, 0.2 * v)

    def conv(h_ref, v, w_ref, b_ref):
        # Dilated k=3 conv as 3 bf16 MXU matmuls over lane-shifted windows of a
        # single aligned activation store (no concatenate / staging buffer).
        vb = v.astype(jnp.bfloat16)
        h_ref[:, _PAD:_PAD + t2] = vb                     # one aligned store
        lo = h_ref[:, _PAD - dil:_PAD - dil + t2]         # tap 0: v[:, t - dil]
        hi = h_ref[:, _PAD + dil:_PAD + dil + t2]         # tap 2: v[:, t + dil]
        acc = jnp.dot(w_ref[0], lo, preferred_element_type=jnp.float32)
        acc = acc + jnp.dot(w_ref[1], vb, preferred_element_type=jnp.float32)
        acc = acc + jnp.dot(w_ref[2], hi, preferred_element_type=jnp.float32)
        return acc + b_ref[...]

    # Zero ONLY the 2*dil halo lanes actually read by the shifted windows.
    # Done every grid step (cheap) -- never gate this on program_id==0: with
    # dimension_semantics=('parallel',) a second TensorCore never runs step 0.
    zh = jnp.zeros((cin, dil), jnp.bfloat16)
    for h_ref in (ha_ref, hb_ref):
        h_ref[:, _PAD - dil:_PAD] = zh
        h_ref[:, _PAD + t2:_PAD + t2 + dil] = zh

    def body(b, carry):
        x = x_ref[b].astype(jnp.float32)                  # (Cin, T2)

        # main path: Conv1d -> LeakyReLU.  Store into out_ref immediately so no
        # (Cout, T2) f32 temporary stays live across the residual convs.
        main = lrelu(conv(ha_ref, x, wm_ref, bm_ref))
        out_ref[b] = main.astype(out_ref.dtype)

        # residual: FiLM(pitch) -> ConvBlock -> FiLM(noisy) -> ConvBlock
        fp = fp_ref[b].astype(jnp.float32)
        h = lrelu(conv(hb_ref, fp[:cin] * x + fp[cin:], w1_ref, b1_ref))
        fn = fn_ref[b].astype(jnp.float32)
        res = lrelu(conv(ha_ref, fn[:cin] * h + fn[cin:], w2_ref, b2_ref))

        out_ref[b] = (out_ref[b].astype(jnp.float32) + res).astype(out_ref.dtype)
        return carry

    lax.fori_loop(0, bt, body, 0, unroll=True)


def _split_conv_weight(w):
    """(C_out, C_in, 3) PyTorch Conv1d weight -> (3, C_out, C_in) tap-major."""
    return jnp.transpose(w, (2, 0, 1))


def _pick_block_batch(batch, bytes_per_row, budget_bytes=8 << 20, max_bt=8):
    """Largest divisor of `batch` (<= max_bt) whose block fits the VMEM budget."""
    bt = 1
    for cand in range(2, min(batch, max_bt) + 1):
        if batch % cand == 0 and cand * bytes_per_row <= budget_bytes:
            bt = cand
    return bt


def ublock_forward(x, film_pitch, film_noisy, params, dilation, out_dtype=None,
                   vmem_limit_bytes=48 * 1024 * 1024):
    """x: (B, Cin, L); film_*: (B, 2*Cin, 2*L).  Returns (B, Cout, 2*L) (NCL)."""
    B, cin, L = x.shape
    t2 = 2 * L
    cout = params["wm"].shape[0]
    if out_dtype is None:
        out_dtype = x.dtype
    assert t2 % 128 == 0, "demo kernel assumes 2*L is a multiple of 128"
    assert 0 < dilation <= min(_PAD, t2)

    # nn.Upsample(scale_factor=2), nearest, on the length axis -- materialized
    # by XLA in bf16 so its extra HBM write + the kernel read are half-width.
    # TODO(synk): fold the 2x repeat into the kernel (stride-2 lane interleave
    #             into the conv scratch) to remove this HBM round trip entirely.
    x_up = jnp.repeat(x.astype(jnp.bfloat16), 2, axis=2)   # (B, Cin, T2) bf16

    wm = _split_conv_weight(params["wm"]).astype(jnp.bfloat16)
    w1 = _split_conv_weight(params["w1"]).astype(jnp.bfloat16)
    w2 = _split_conv_weight(params["w2"]).astype(jnp.bfloat16)
    bm = params["bm"].reshape(cout, 1).astype(jnp.float32)
    b1 = params["b1"].reshape(cin, 1).astype(jnp.float32)
    b2 = params["b2"].reshape(cout, 1).astype(jnp.float32)

    # Amortize per-grid-step overhead: several batch rows per step (x2 for the
    # double-buffered input/output blocks).
    bytes_per_row = t2 * (cin * x_up.dtype.itemsize
                          + 2 * cin * film_pitch.dtype.itemsize
                          + 2 * cin * film_noisy.dtype.itemsize
                          + cout * jnp.dtype(out_dtype).itemsize)
    bt = _pick_block_batch(B, 2 * bytes_per_row)
    grid = (B // bt,)

    kernel = functools.partial(_ublock_kernel, cin=cin, t2=t2, dil=dilation, bt=bt)

    per_b = lambda c: pl.BlockSpec((bt, c, t2), lambda i: (i, 0, 0))
    full = lambda shape: pl.BlockSpec(shape, lambda i: tuple(0 for _ in shape))

    # TODO(synk): for production sizes on v7x (64 MiB VMEM, 2 TCs) add a T2
    #             tile axis with a 2*dil halo per tile; not needed here.
    out = pl.pallas_call(
        kernel,
        out_shape=jax.ShapeDtypeStruct((B, cout, t2), out_dtype),
        grid_spec=pltpu.PrefetchScalarGridSpec(
            num_scalar_prefetch=0,
            grid=grid,
            in_specs=[
                per_b(cin),                        # x_up (bf16)
                per_b(2 * cin),                    # film_pitch (packed scale/shift)
                per_b(2 * cin),                    # film_noisy (packed scale/shift)
                full((3, cout, cin)), full((cout, 1)),   # main conv
                full((3, cin, cin)), full((cin, 1)),     # ConvBlock 1
                full((3, cout, cin)), full((cout, 1)),   # ConvBlock 2
            ],
            out_specs=per_b(cout),
            scratch_shapes=[
                pltpu.VMEM((cin, t2 + 2 * _PAD), jnp.bfloat16),
                pltpu.VMEM((cin, t2 + 2 * _PAD), jnp.bfloat16),
            ],
        ),
        compiler_params=pltpu.CompilerParams(
            dimension_semantics=("parallel",),
            vmem_limit_bytes=vmem_limit_bytes,
        ),
    )(x_up, film_pitch, film_noisy, wm, bm, w1, b1, w2, b2)
    return out


def ublock_reference(x, film_pitch, film_noisy, params, dilation):
    """Pure-JAX reference mirroring the PyTorch module semantics (NCL layout),
    with the kernel's bf16-operand / f32-accumulate numerics."""
    f32 = jnp.float32
    lrelu = lambda v: jnp.where(v > 0, v, 0.2 * v)

    def conv1d(h, w, b):   # h: (B, Cin, T), w: (Cout, Cin, 3)  (PyTorch Conv1d)
        h = h.astype(jnp.bfloat16).astype(f32)
        w = w.astype(jnp.bfloat16).astype(f32)
        y = lax.conv_general_dilated(
            h, w, window_strides=(1,), padding=[(dilation, dilation)],
            rhs_dilation=(dilation,),
            dimension_numbers=("NCW", "OIW", "NCW"),
            precision=lax.Precision.HIGHEST)
        return y + b.astype(f32)[None, :, None]

    x_up = jnp.repeat(x.astype(jnp.bfloat16), 2, axis=2).astype(f32)
    main = lrelu(conv1d(x_up, params["wm"], params["bm"]))

    ps, pb = jnp.split(film_pitch.astype(f32), 2, axis=1)
    ns, nb = jnp.split(film_noisy.astype(f32), 2, axis=1)
    h = lrelu(conv1d(ps * x_up + pb, params["w1"], params["b1"]))
    res = lrelu(conv1d(ns * h + nb, params["w2"], params["b2"]))
    return main + res


if __name__ == "__main__":
    B, Cin, Cout, L, dilation = 2, 8, 16, 128, 2

    key = jax.random.PRNGKey(0)
    ks = jax.random.split(key, 9)
    params = {
        "wm": jax.random.normal(ks[0], (Cout, Cin, 3), jnp.float32) * 0.1,
        "bm": jax.random.normal(ks[1], (Cout,), jnp.float32) * 0.1,
        "w1": jax.random.normal(ks[2], (Cin, Cin, 3), jnp.float32) * 0.1,
        "b1": jax.random.normal(ks[3], (Cin,), jnp.float32) * 0.1,
        "w2": jax.random.normal(ks[4], (Cout, Cin, 3), jnp.float32) * 0.1,
        "b2": jax.random.normal(ks[5], (Cout,), jnp.float32) * 0.1,
    }

    x = jax.random.normal(ks[6], (B, Cin, L), jnp.float32)
    # FiLM tensors are the dominant HBM stream -> keep them bf16 in HBM.
    film_pitch = jax.random.normal(ks[7], (B, 2 * Cin, 2 * L), jnp.bfloat16)
    film_noisy = jax.random.normal(ks[8], (B, 2 * Cin, 2 * L), jnp.bfloat16)

    out = jax.block_until_ready(
        ublock_forward(x, film_pitch, film_noisy, params, dilation))
    ref = jax.block_until_ready(
        ublock_reference(x, film_pitch, film_noisy, params, dilation))

    assert out.shape == (B, Cout, 2 * L), out.shape
    np.testing.assert_allclose(np.asarray(out, dtype=np.float32),
                               np.asarray(ref, dtype=np.float32),
                               atol=2e-3, rtol=2e-3)
    print("KERNEL_OK")
</pallas_src>

<mosaic_0001>
module attributes {stable_mosaic.version = 11 : i64} {
  func.func @_ublock_kernel(%arg0: i32, %arg1: memref<2x8x256xbf16, #tpu.memory_space<vmem>>, %arg2: memref<2x16x256xbf16, #tpu.memory_space<vmem>>, %arg3: memref<2x16x256xbf16, #tpu.memory_space<vmem>>, %arg4: memref<3x16x8xbf16, #tpu.memory_space<vmem>>, %arg5: memref<16x1xf32, #tpu.memory_space<vmem>>, %arg6: memref<3x8x8xbf16, #tpu.memory_space<vmem>>, %arg7: memref<8x1xf32, #tpu.memory_space<vmem>>, %arg8: memref<3x16x8xbf16, #tpu.memory_space<vmem>>, %arg9: memref<16x1xf32, #tpu.memory_space<vmem>>, %arg10: memref<2x16x256xf32, #tpu.memory_space<vmem>>, %arg11: memref<8x512xbf16, #tpu.memory_space<vmem>>, %arg12: memref<8x512xbf16, #tpu.memory_space<vmem>>) attributes {dimension_semantics = [#tpu.dimension_semantics<parallel>], iteration_bounds = array<i64: 1>, scalar_prefetch = 0 : i64, scratch_operands = 2 : i64, tpu.core_type = #tpu.core_type<tc>, window_params = [{transform_indices = @transform_0, window_bounds = array<i64: 2, 8, 256>}, {transform_indices = @transform_1, window_bounds = array<i64: 2, 16, 256>}, {transform_indices = @transform_2, window_bounds = array<i64: 2, 16, 256>}, {pipeline_mode = #tpu.pipeline_mode<synchronous>, transform_indices = @transform_3, window_bounds = array<i64: 3, 16, 8>}, {pipeline_mode = #tpu.pipeline_mode<synchronous>, transform_indices = @transform_4, window_bounds = array<i64: 16, 1>}, {pipeline_mode = #tpu.pipeline_mode<synchronous>, transform_indices = @transform_5, window_bounds = array<i64: 3, 8, 8>}, {pipeline_mode = #tpu.pipeline_mode<synchronous>, transform_indices = @transform_6, window_bounds = array<i64: 8, 1>}, {pipeline_mode = #tpu.pipeline_mode<synchronous>, transform_indices = @transform_7, window_bounds = array<i64: 3, 16, 8>}, {pipeline_mode = #tpu.pipeline_mode<synchronous>, transform_indices = @transform_8, window_bounds = array<i64: 16, 1>}, {transform_indices = @transform_9, window_bounds = array<i64: 2, 16, 256>}]} {
    %cst = arith.constant 0.000000e+00 : bf16
    %0 = vector.broadcast %cst : bf16 to vector<8x2xbf16>
    %c0 = arith.constant 0 : index
    %c126 = arith.constant 126 : index
    %1 = vector.load %arg11[%c0, %c126] : memref<8x512xbf16, #tpu.memory_space<vmem>>, vector<8x2xbf16>
    tpu.vector_store %arg11[%c0, %c126], %0 {strides = array<i32>} : memref<8x512xbf16, #tpu.memory_space<vmem>>, vector<8x2xbf16>,
    %c0_0 = arith.constant 0 : index
    %c384 = arith.constant 384 : index
    %2 = vector.load %arg11[%c0_0, %c384] : memref<8x512xbf16, #tpu.memory_space<vmem>>, vector<8x2xbf16>
    tpu.vector_store %arg11[%c0_0, %c384], %0 {strides = array<i32>} : memref<8x512xbf16, #tpu.memory_space<vmem>>, vector<8x2xbf16>,
    %c0_1 = arith.constant 0 : index
    %c126_2 = arith.constant 126 : index
    %3 = vector.load %arg12[%c0_1, %c126_2] : memref<8x512xbf16, #tpu.memory_space<vmem>>, vector<8x2xbf16>
    tpu.vector_store %arg12[%c0_1, %c126_2], %0 {strides = array<i32>} : memref<8x512xbf16, #tpu.memory_space<vmem>>, vector<8x2xbf16>,
    %c0_3 = arith.constant 0 : index
    %c384_4 = arith.constant 384 : index
    %4 = vector.load %arg12[%c0_3, %c384_4] : memref<8x512xbf16, #tpu.memory_space<vmem>>, vector<8x2xbf16>
    tpu.vector_store %arg12[%c0_3, %c384_4], %0 {strides = array<i32>} : memref<8x512xbf16, #tpu.memory_space<vmem>>, vector<8x2xbf16>,
    %c0_i32 = arith.constant 0 : i32
    %5 = arith.index_cast %c0_i32 : i32 to index
    %c0_5 = arith.constant 0 : index
    %c0_6 = arith.constant 0 : index
    %6 = vector.load %arg1[%5, %c0_5, %c0_6] : memref<2x8x256xbf16, #tpu.memory_space<vmem>>, vector<1x8x256xbf16>
    %7 = vector.shape_cast %6 : vector<1x8x256xbf16> to vector<8x256xbf16>
    %8 = arith.extf %7 : vector<8x256xbf16> to vector<8x256xf32>
    %9 = arith.truncf %8 : vector<8x256xf32> to vector<8x256xbf16>
    %c0_7 = arith.constant 0 : index
    %c128 = arith.constant 128 : index
    %10 = vector.load %arg11[%c0_7, %c128] : memref<8x512xbf16, #tpu.memory_space<vmem>>, vector<8x256xbf16>
    tpu.vector_store %arg11[%c0_7, %c128], %9 {strides = array<i32>} : memref<8x512xbf16, #tpu.memory_space<vmem>>, vector<8x256xbf16>,
    %c0_8 = arith.constant 0 : index
    %c126_9 = arith.constant 126 : index
    %11 = vector.load %arg11[%c0_8, %c126_9] : memref<8x512xbf16, #tpu.memory_space<vmem>>, vector<8x256xbf16>
    %c0_10 = arith.constant 0 : index
    %c130 = arith.constant 130 : index
    %12 = vector.load %arg11[%c0_10, %c130] : memref<8x512xbf16, #tpu.memory_space<vmem>>, vector<8x256xbf16>
    %c0_11 = arith.constant 0 : index
    %c0_12 = arith.constant 0 : index
    %c0_13 = arith.constant 0 : index
    %13 = vector.load %arg4[%c0_11, %c0_12, %c0_13] : memref<3x16x8xbf16, #tpu.memory_space<vmem>>, vector<1x16x8xbf16>
    %14 = vector.shape_cast %13 : vector<1x16x8xbf16> to vector<16x8xbf16>
    %cst_14 = arith.constant dense<0.000000e+00> : vector<16x256xf32>
    %15 = tpu.matmul %14, %11, %cst_14 {dimension_numbers = #tpu.dot_dimension_numbers<[1], [0], [0], [1], [0, 0, 1, 1], [], []>} : vector<16x8xbf16>, vector<8x256xbf16>, vector<16x256xf32> -> vector<16x256xf32>
    %c1 = arith.constant 1 : index
    %c0_15 = arith.constant 0 : index
    %c0_16 = arith.constant 0 : index
    %16 = vector.load %arg4[%c1, %c0_15, %c0_16] : memref<3x16x8xbf16, #tpu.memory_space<vmem>>, vector<1x16x8xbf16>
    %17 = vector.shape_cast %16 : vector<1x16x8xbf16> to vector<16x8xbf16>
    %cst_17 = arith.constant dense<0.000000e+00> : vector<16x256xf32>
    %18 = tpu.matmul %17, %9, %cst_17 {dimension_numbers = #tpu.dot_dimension_numbers<[1], [0], [0], [1], [0, 0, 1, 1], [], []>} : vector<16x8xbf16>, vector<8x256xbf16>, vector<16x256xf32> -> vector<16x256xf32>
    %19 = arith.addf %15, %18 : vector<16x256xf32>
    %c2 = arith.constant 2 : index
    %c0_18 = arith.constant 0 : index
    %c0_19 = arith.constant 0 : index
    %20 = vector.load %arg4[%c2, %c0_18, %c0_19] : memref<3x16x8xbf16, #tpu.memory_space<vmem>>, vector<1x16x8xbf16>
    %21 = vector.shape_cast %20 : vector<1x16x8xbf16> to vector<16x8xbf16>
    %cst_20 = arith.constant dense<0.000000e+00> : vector<16x256xf32>
    %22 = tpu.matmul %21, %12, %cst_20 {dimension_numbers = #tpu.dot_dimension_numbers<[1], [0], [0], [1], [0, 0, 1, 1], [], []>} : vector<16x8xbf16>, vector<8x256xbf16>, vector<16x256xf32> -> vector<16x256xf32>
    %23 = arith.addf %19, %22 : vector<16x256xf32>
    %c0_21 = arith.constant 0 : index
    %c0_22 = arith.constant 0 : index
    %24 = vector.load %arg5[%c0_21, %c0_22] : memref<16x1xf32, #tpu.memory_space<vmem>>, vector<16x1xf32>
    %25 = vector.broadcast %24 : vector<16x1xf32> to vector<16x256xf32>
    %26 = arith.addf %23, %25 : vector<16x256xf32>
    %cst_23 = arith.constant 0.000000e+00 : f32
    %27 = vector.broadcast %cst_23 : f32 to vector<16x256xf32>
    %28 = arith.cmpf ogt, %26, %27 : vector<16x256xf32>
    %cst_24 = arith.constant 2.000000e-01 : f32
    %29 = vector.broadcast %cst_24 : f32 to vector<16x256xf32>
    %30 = arith.mulf %29, %26 : vector<16x256xf32>
    %31 = arith.select %28, %26, %30 : vector<16x256xi1>, vector<16x256xf32>
    %32 = arith.index_cast %c0_i32 : i32 to index
    %c0_25 = arith.constant 0 : index
    %c0_26 = arith.constant 0 : index
    %33 = vector.load %arg10[%32, %c0_25, %c0_26] : memref<2x16x256xf32, #tpu.memory_space<vmem>>, vector<1x16x256xf32>
    %34 = vector.shape_cast %33 : vector<1x16x256xf32> to vector<16x256xf32>
    %35 = vector.shape_cast %31 : vector<16x256xf32> to vector<1x16x256xf32>
    tpu.vector_store %arg10[%32, %c0_25, %c0_26], %35 {strides = array<i32>} : memref<2x16x256xf32, #tpu.memory_space<vmem>>, vector<1x16x256xf32>,
    %36 = arith.index_cast %c0_i32 : i32 to index
    %c0_27 = arith.constant 0 : index
    %c0_28 = arith.constant 0 : index
    %37 = vector.load %arg2[%36, %c0_27, %c0_28] : memref<2x16x256xbf16, #tpu.memory_space<vmem>>, vector<1x16x256xbf16>
    %38 = vector.shape_cast %37 : vector<1x16x256xbf16> to vector<16x256xbf16>
    %39 = arith.extf %38 : vector<16x256xbf16> to vector<16x256xf32>
    %40 = vector.extract_strided_slice %39 {offsets = [0, 0], sizes = [8, 256], strides = [1, 1]} : vector<16x256xf32> to vector<8x256xf32>
    %41 = arith.mulf %40, %8 : vector<8x256xf32>
    %42 = vector.extract_strided_slice %39 {offsets = [8, 0], sizes = [8, 256], strides = [1, 1]} : vector<16x256xf32> to vector<8x256xf32>
    %43 = arith.addf %41, %42 : vector<8x256xf32>
    %44 = arith.truncf %43 : vector<8x256xf32> to vector<8x256xbf16>
    %c0_29 = arith.constant 0 : index
    %c128_30 = arith.constant 128 : index
    %45 = vector.load %arg12[%c0_29, %c128_30] : memref<8x512xbf16, #tpu.memory_space<vmem>>, vector<8x256xbf16>
    tpu.vector_store %arg12[%c0_29, %c128_30], %44 {strides = array<i32>} : memref<8x512xbf16, #tpu.memory_space<vmem>>, vector<8x256xbf16>,
    %c0_31 = arith.constant 0 : index
    %c126_32 = arith.constant 126 : index
    %46 = vector.load %arg12[%c0_31, %c126_32] : memref<8x512xbf16, #tpu.memory_space<vmem>>, vector<8x256xbf16>
    %c0_33 = arith.constant 0 : index
    %c130_34 = arith.constant 130 : index
    %47 = vector.load %arg12[%c0_33, %c130_34] : memref<8x512xbf16, #tpu.memory_space<vmem>>, vector<8x256xbf16>
    %c0_35 = arith.constant 0 : index
    %c0_36 = arith.constant 0 : index
    %c0_37 = arith.constant 0 : index
    %48 = vector.load %arg6[%c0_35, %c0_36, %c0_37] : memref<3x8x8xbf16, #tpu.memory_space<vmem>>, vector<1x8x8xbf16>
    %49 = vector.shape_cast %48 : vector<1x8x8xbf16> to vector<8x8xbf16>
    %cst_38 = arith.constant dense<0.000000e+00> : vector<8x256xf32>
    %50 = tpu.matmul %49, %46, %cst_38 {dimension_numbers = #tpu.dot_dimension_numbers<[1], [0], [0], [1], [0, 0, 1, 1], [], []>} : vector<8x8xbf16>, vector<8x256xbf16>, vector<8x256xf32> -> vector<8x256xf32>
    %c1_39 = arith.constant 1 : index
    %c0_40 = arith.constant 0 : index
    %c0_41 = arith.constant 0 : index
    %51 = vector.load %arg6[%c1_39, %c0_40, %c0_41] : memref<3x8x8xbf16, #tpu.memory_space<vmem>>, vector<1x8x8xbf16>
    %52 = vector.shape_cast %51 : vector<1x8x8xbf16> to vector<8x8xbf16>
    %cst_42 = arith.constant dense<0.000000e+00> : vector<8x256xf32>
    %53 = tpu.matmul %52, %44, %cst_42 {dimension_numbers = #tpu.dot_dimension_numbers<[1], [0], [0], [1], [0, 0, 1, 1], [], []>} : vector<8x8xbf16>, vector<8x256xbf16>, vector<8x256xf32> -> vector<8x256xf32>
    %54 = arith.addf %50, %53 : vector<8x256xf32>
    %c2_43 = arith.constant 2 : index
    %c0_44 = arith.constant 0 : index
    %c0_45 = arith.constant 0 : index
    %55 = vector.load %arg6[%c2_43, %c0_44, %c0_45] : memref<3x8x8xbf16, #tpu.memory_space<vmem>>, vector<1x8x8xbf16>
    %56 = vector.shape_cast %55 : vector<1x8x8xbf16> to vector<8x8xbf16>
    %cst_46 = arith.constant dense<0.000000e+00> : vector<8x256xf32>
    %57 = tpu.matmul %56, %47, %cst_46 {dimension_numbers = #tpu.dot_dimension_numbers<[1], [0], [0], [1], [0, 0, 1, 1], [], []>} : vector<8x8xbf16>, vector<8x256xbf16>, vector<8x256xf32> -> vector<8x256xf32>
    %58 = arith.addf %54, %57 : vector<8x256xf32>
    %c0_47 = arith.constant 0 : index
    %c0_48 = arith.constant 0 : index
    %59 = vector.load %arg7[%c0_47, %c0_48] : memref<8x1xf32, #tpu.memory_space<vmem>>, vector<8x1xf32>
    %60 = vector.broadcast %59 : vector<8x1xf32> to vector<8x256xf32>
    %61 = arith.addf %58, %60 : vector<8x256xf32>
    %cst_49 = arith.constant 0.000000e+00 : f32
    %62 = vector.broadcast %cst_49 : f32 to vector<8x256xf32>
    %63 = arith.cmpf ogt, %61, %62 : vector<8x256xf32>
    %cst_50 = arith.constant 2.000000e-01 : f32
    %64 = vector.broadcast %cst_50 : f32 to vector<8x256xf32>
    %65 = arith.mulf %64, %61 : vector<8x256xf32>
    %66 = arith.select %63, %61, %65 : vector<8x256xi1>, vector<8x256xf32>
    %67 = arith.index_cast %c0_i32 : i32 to index
    %c0_51 = arith.constant 0 : index
    %c0_52 = arith.constant 0 : index
    %68 = vector.load %arg3[%67, %c0_51, %c0_52] : memref<2x16x256xbf16, #tpu.memory_space<vmem>>, vector<1x16x256xbf16>
    %69 = vector.shape_cast %68 : vector<1x16x256xbf16> to vector<16x256xbf16>
    %70 = arith.extf %69 : vector<16x256xbf16> to vector<16x256xf32>
    %71 = vector.extract_strided_slice %70 {offsets = [0, 0], sizes = [8, 256], strides = [1, 1]} : vector<16x256xf32> to vector<8x256xf32>
    %72 = arith.mulf %71, %66 : vector<8x256xf32>
    %73 = vector.extract_strided_slice %70 {offsets = [8, 0], sizes = [8, 256], strides = [1, 1]} : vector<16x256xf32> to vector<8x256xf32>
    %74 = arith.addf %72, %73 : vector<8x256xf32>
    %75 = arith.truncf %74 : vector<8x256xf32> to vector<8x256xbf16>
    %c0_53 = arith.constant 0 : index
    %c128_54 = arith.constant 128 : index
    %76 = vector.load %arg11[%c0_53, %c128_54] : memref<8x512xbf16, #tpu.memory_space<vmem>>, vector<8x256xbf16>
    tpu.vector_store %arg11[%c0_53, %c128_54], %75 {strides = array<i32>} : memref<8x512xbf16, #tpu.memory_space<vmem>>, vector<8x256xbf16>,
    %c0_55 = arith.constant 0 : index
    %c126_56 = arith.constant 126 : index
    %77 = vector.load %arg11[%c0_55, %c126_56] : memref<8x512xbf16, #tpu.memory_space<vmem>>, vector<8x256xbf16>
    %c0_57 = arith.constant 0 : index
    %c130_58 = arith.constant 130 : index
    %78 = vector.load %arg11[%c0_57, %c130_58] : memref<8x512xbf16, #tpu.memory_space<vmem>>, vector<8x256xbf16>
    %c0_59 = arith.constant 0 : index
    %c0_60 = arith.constant 0 : index
    %c0_61 = arith.constant 0 : index
    %79 = vector.load %arg8[%c0_59, %c0_60, %c0_61] : memref<3x16x8xbf16, #tpu.memory_space<vmem>>, vector<1x16x8xbf16>
    %80 = vector.shape_cast %79 : vector<1x16x8xbf16> to vector<16x8xbf16>
    %cst_62 = arith.constant dense<0.000000e+00> : vector<16x256xf32>
    %81 = tpu.matmul %80, %77, %cst_62 {dimension_numbers = #tpu.dot_dimension_numbers<[1], [0], [0], [1], [0, 0, 1, 1], [], []>} : vector<16x8xbf16>, vector<8x256xbf16>, vector<16x256xf32> -> vector<16x256xf32>
    %c1_63 = arith.constant 1 : index
    %c0_64 = arith.constant 0 : index
    %c0_65 = arith.constant 0 : index
    %82 = vector.load %arg8[%c1_63, %c0_64, %c0_65] : memref<3x16x8xbf16, #tpu.memory_space<vmem>>, vector<1x16x8xbf16>
    %83 = vector.shape_cast %82 : vector<1x16x8xbf16> to vector<16x8xbf16>
    %cst_66 = arith.constant dense<0.000000e+00> : vector<16x256xf32>
    %84 = tpu.matmul %83, %75, %cst_66 {dimension_numbers = #tpu.dot_dimension_numbers<[1], [0], [0], [1], [0, 0, 1, 1], [], []>} : vector<16x8xbf16>, vector<8x256xbf16>, vector<16x256xf32> -> vector<16x256xf32>
    %85 = arith.addf %81, %84 : vector<16x256xf32>
    %c2_67 = arith.constant 2 : index
    %c0_68 = arith.constant 0 : index
    %c0_69 = arith.constant 0 : index
    %86 = vector.load %arg8[%c2_67, %c0_68, %c0_69] : memref<3x16x8xbf16, #tpu.memory_space<vmem>>, vector<1x16x8xbf16>
    %87 = vector.shape_cast %86 : vector<1x16x8xbf16> to vector<16x8xbf16>
    %cst_70 = arith.constant dense<0.000000e+00> : vector<16x256xf32>
    %88 = tpu.matmul %87, %78, %cst_70 {dimension_numbers = #tpu.dot_dimension_numbers<[1], [0], [0], [1], [0, 0, 1, 1], [], []>} : vector<16x8xbf16>, vector<8x256xbf16>, vector<16x256xf32> -> vector<16x256xf32>
    %89 = arith.addf %85, %88 : vector<16x256xf32>
    %c0_71 = arith.constant 0 : index
    %c0_72 = arith.constant 0 : index
    %90 = vector.load %arg9[%c0_71, %c0_72] : memref<16x1xf32, #tpu.memory_space<vmem>>, vector<16x1xf32>
    %91 = vector.broadcast %90 : vector<16x1xf32> to vector<16x256xf32>
    %92 = arith.addf %89, %91 : vector<16x256xf32>
    %cst_73 = arith.constant 0.000000e+00 : f32
    %93 = vector.broadcast %cst_73 : f32 to vector<16x256xf32>
    %94 = arith.cmpf ogt, %92, %93 : vector<16x256xf32>
    %cst_74 = arith.constant 2.000000e-01 : f32
    %95 = vector.broadcast %cst_74 : f32 to vector<16x256xf32>
    %96 = arith.mulf %95, %92 : vector<16x256xf32>
    %97 = arith.select %94, %92, %96 : vector<16x256xi1>, vector<16x256xf32>
    %98 = arith.index_cast %c0_i32 : i32 to index
    %c0_75 = arith.constant 0 : index
    %c0_76 = arith.constant 0 : index
    %99 = vector.load %arg10[%98, %c0_75, %c0_76] : memref<2x16x256xf32, #tpu.memory_space<vmem>>, vector<1x16x256xf32>
    %100 = vector.shape_cast %99 : vector<1x16x256xf32> to vector<16x256xf32>
    %101 = arith.addf %100, %97 : vector<16x256xf32>
    %102 = arith.index_cast %c0_i32 : i32 to index
    %c0_77 = arith.constant 0 : index
    %c0_78 = arith.constant 0 : index
    %103 = vector.load %arg10[%102, %c0_77, %c0_78] : memref<2x16x256xf32, #tpu.memory_space<vmem>>, vector<1x16x256xf32>
    %104 = vector.shape_cast %103 : vector<1x16x256xf32> to vector<16x256xf32>
    %105 = vector.shape_cast %101 : vector<16x256xf32> to vector<1x16x256xf32>
    tpu.vector_store %arg10[%102, %c0_77, %c0_78], %105 {strides = array<i32>} : memref<2x16x256xf32, #tpu.memory_space<vmem>>, vector<1x16x256xf32>,
    %c1_i32 = arith.constant 1 : i32
    %106 = arith.index_cast %c1_i32 : i32 to index
    %c0_79 = arith.constant 0 : index
    %c0_80 = arith.constant 0 : index
    %107 = vector.load %arg1[%106, %c0_79, %c0_80] : memref<2x8x256xbf16, #tpu.memory_space<vmem>>, vector<1x8x256xbf16>
    %108 = vector.shape_cast %107 : vector<1x8x256xbf16> to vector<8x256xbf16>
    %109 = arith.extf %108 : vector<8x256xbf16> to vector<8x256xf32>
    %110 = arith.truncf %109 : vector<8x256xf32> to vector<8x256xbf16>
    %c0_81 = arith.constant 0 : index
    %c128_82 = arith.constant 128 : index
    %111 = vector.load %arg11[%c0_81, %c128_82] : memref<8x512xbf16, #tpu.memory_space<vmem>>, vector<8x256xbf16>
    tpu.vector_store %arg11[%c0_81, %c128_82], %110 {strides = array<i32>} : memref<8x512xbf16, #tpu.memory_space<vmem>>, vector<8x256xbf16>,
    %c0_83 = arith.constant 0 : index
    %c126_84 = arith.constant 126 : index
    %112 = vector.load %arg11[%c0_83, %c126_84] : memref<8x512xbf16, #tpu.memory_space<vmem>>, vector<8x256xbf16>
    %c0_85 = arith.constant 0 : index
    %c130_86 = arith.constant 130 : index
    %113 = vector.load %arg11[%c0_85, %c130_86] : memref<8x512xbf16, #tpu.memory_space<vmem>>, vector<8x256xbf16>
    %c0_87 = arith.constant 0 : index
    %c0_88 = arith.constant 0 : index
    %c0_89 = arith.constant 0 : index
    %114 = vector.load %arg4[%c0_87, %c0_88, %c0_89] : memref<3x16x8xbf16, #tpu.memory_space<vmem>>, vector<1x16x8xbf16>
    %115 = vector.shape_cast %114 : vector<1x16x8xbf16> to vector<16x8xbf16>
    %cst_90 = arith.constant dense<0.000000e+00> : vector<16x256xf32>
    %116 = tpu.matmul %115, %112, %cst_90 {dimension_numbers = #tpu.dot_dimension_numbers<[1], [0], [0], [1], [0, 0, 1, 1], [], []>} : vector<16x8xbf16>, vector<8x256xbf16>, vector<16x256xf32> -> vector<16x256xf32>
    %c1_91 = arith.constant 1 : index
    %c0_92 = arith.constant 0 : index
    %c0_93 = arith.constant 0 : index
    %117 = vector.load %arg4[%c1_91, %c0_92, %c0_93] : memref<3x16x8xbf16, #tpu.memory_space<vmem>>, vector<1x16x8xbf16>
    %118 = vector.shape_cast %117 : vector<1x16x8xbf16> to vector<16x8xbf16>
    %cst_94 = arith.constant dense<0.000000e+00> : vector<16x256xf32>
    %119 = tpu.matmul %118, %110, %cst_94 {dimension_numbers = #tpu.dot_dimension_numbers<[1], [0], [0], [1], [0, 0, 1, 1], [], []>} : vector<16x8xbf16>, vector<8x256xbf16>, vector<16x256xf32> -> vector<16x256xf32>
    %120 = arith.addf %116, %119 : vector<16x256xf32>
    %c2_95 = arith.constant 2 : index
    %c0_96 = arith.constant 0 : index
    %c0_97 = arith.constant 0 : index
    %121 = vector.load %arg4[%c2_95, %c0_96, %c0_97] : memref<3x16x8xbf16, #tpu.memory_space<vmem>>, vector<1x16x8xbf16>
    %122 = vector.shape_cast %121 : vector<1x16x8xbf16> to vector<16x8xbf16>
    %cst_98 = arith.constant dense<0.000000e+00> : vector<16x256xf32>
    %123 = tpu.matmul %122, %113, %cst_98 {dimension_numbers = #tpu.dot_dimension_numbers<[1], [0], [0], [1], [0, 0, 1, 1], [], []>} : vector<16x8xbf16>, vector<8x256xbf16>, vector<16x256xf32> -> vector<16x256xf32>
    %124 = arith.addf %120, %123 : vector<16x256xf32>
    %c0_99 = arith.constant 0 : index
    %c0_100 = arith.constant 0 : index
    %125 = vector.load %arg5[%c0_99, %c0_100] : memref<16x1xf32, #tpu.memory_space<vmem>>, vector<16x1xf32>
    %126 = vector.broadcast %125 : vector<16x1xf32> to vector<16x256xf32>
    %127 = arith.addf %124, %126 : vector<16x256xf32>
    %cst_101 = arith.constant 0.000000e+00 : f32
    %128 = vector.broadcast %cst_101 : f32 to vector<16x256xf32>
    %129 = arith.cmpf ogt, %127, %128 : vector<16x256xf32>
    %cst_102 = arith.constant 2.000000e-01 : f32
    %130 = vector.broadcast %cst_102 : f32 to vector<16x256xf32>
    %131 = arith.mulf %130, %127 : vector<16x256xf32>
    %132 = arith.select %129, %127, %131 : vector<16x256xi1>, vector<16x256xf32>
    %133 = arith.index_cast %c1_i32 : i32 to index
    %c0_103 = arith.constant 0 : index
    %c0_104 = arith.constant 0 : index
    %134 = vector.load %arg10[%133, %c0_103, %c0_104] : memref<2x16x256xf32, #tpu.memory_space<vmem>>, vector<1x16x256xf32>
    %135 = vector.shape_cast %134 : vector<1x16x256xf32> to vector<16x256xf32>
    %136 = vector.shape_cast %132 : vector<16x256xf32> to vector<1x16x256xf32>
    tpu.vector_store %arg10[%133, %c0_103, %c0_104], %136 {strides = array<i32>} : memref<2x16x256xf32, #tpu.memory_space<vmem>>, vector<1x16x256xf32>,
    %137 = arith.index_cast %c1_i32 : i32 to index
    %c0_105 = arith.constant 0 : index
    %c0_106 = arith.constant 0 : index
    %138 = vector.load %arg2[%137, %c0_105, %c0_106] : memref<2x16x256xbf16, #tpu.memory_space<vmem>>, vector<1x16x256xbf16>
    %139 = vector.shape_cast %138 : vector<1x16x256xbf16> to vector<16x256xbf16>
    %140 = arith.extf %139 : vector<16x256xbf16> to vector<16x256xf32>
    %141 = vector.extract_strided_slice %140 {offsets = [0, 0], sizes = [8, 256], strides = [1, 1]} : vector<16x256xf32> to vector<8x256xf32>
    %142 = arith.mulf %141, %109 : vector<8x256xf32>
    %143 = vector.extract_strided_slice %140 {offsets = [8, 0], sizes = [8, 256], strides = [1, 1]} : vector<16x256xf32> to vector<8x256xf32>
    %144 = arith.addf %142, %143 : vector<8x256xf32>
    %145 = arith.truncf %144 : vector<8x256xf32> to vector<8x256xbf16>
    %c0_107 = arith.constant 0 : index
    %c128_108 = arith.constant 128 : index
    %146 = vector.load %arg12[%c0_107, %c128_108] : memref<8x512xbf16, #tpu.memory_space<vmem>>, vector<8x256xbf16>
    tpu.vector_store %arg12[%c0_107, %c128_108], %145 {strides = array<i32>} : memref<8x512xbf16, #tpu.memory_space<vmem>>, vector<8x256xbf16>,
    %c0_109 = arith.constant 0 : index
    %c126_110 = arith.constant 126 : index
    %147 = vector.load %arg12[%c0_109, %c126_110] : memref<8x512xbf16, #tpu.memory_space<vmem>>, vector<8x256xbf16>
    %c0_111 = arith.constant 0 : index
    %c130_112 = arith.constant 130 : index
    %148 = vector.load %arg12[%c0_111, %c130_112] : memref<8x512xbf16, #tpu.memory_space<vmem>>, vector<8x256xbf16>
    %c0_113 = arith.constant 0 : index
    %c0_114 = arith.constant 0 : index
    %c0_115 = arith.constant 0 : index
    %149 = vector.load %arg6[%c0_113, %c0_114, %c0_115] : memref<3x8x8xbf16, #tpu.memory_space<vmem>>, vector<1x8x8xbf16>
    %150 = vector.shape_cast %149 : vector<1x8x8xbf16> to vector<8x8xbf16>
    %cst_116 = arith.constant dense<0.000000e+00> : vector<8x256xf32>
    %151 = tpu.matmul %150, %147, %cst_116 {dimension_numbers = #tpu.dot_dimension_numbers<[1], [0], [0], [1], [0, 0, 1, 1], [], []>} : vector<8x8xbf16>, vector<8x256xbf16>, vector<8x256xf32> -> vector<8x256xf32>
    %c1_117 = arith.constant 1 : index
    %c0_118 = arith.constant 0 : index
    %c0_119 = arith.constant 0 : index
    %152 = vector.load %arg6[%c1_117, %c0_118, %c0_119] : memref<3x8x8xbf16, #tpu.memory_space<vmem>>, vector<1x8x8xbf16>
    %153 = vector.shape_cast %152 : vector<1x8x8xbf16> to vector<8x8xbf16>
    %cst_120 = arith.constant dense<0.000000e+00> : vector<8x256xf32>
    %154 = tpu.matmul %153, %145, %cst_120 {dimension_numbers = #tpu.dot_dimension_numbers<[1], [0], [0], [1], [0, 0, 1, 1], [], []>} : vector<8x8xbf16>, vector<8x256xbf16>, vector<8x256xf32> -> vector<8x256xf32>
    %155 = arith.addf %151, %154 : vector<8x256xf32>
    %c2_121 = arith.constant 2 : index
    %c0_122 = arith.constant 0 : index
    %c0_123 = arith.constant 0 : index
    %156 = vector.load %arg6[%c2_121, %c0_122, %c0_123] : memref<3x8x8xbf16, #tpu.memory_space<vmem>>, vector<1x8x8xbf16>
    %157 = vector.shape_cast %156 : vector<1x8x8xbf16> to vector<8x8xbf16>
    %cst_124 = arith.constant dense<0.000000e+00> : vector<8x256xf32>
    %158 = tpu.matmul %157, %148, %cst_124 {dimension_numbers = #tpu.dot_dimension_numbers<[1], [0], [0], [1], [0, 0, 1, 1], [], []>} : vector<8x8xbf16>, vector<8x256xbf16>, vector<8x256xf32> -> vector<8x256xf32>
    %159 = arith.addf %155, %158 : vector<8x256xf32>
    %c0_125 = arith.constant 0 : index
    %c0_126 = arith.constant 0 : index
    %160 = vector.load %arg7[%c0_125, %c0_126] : memref<8x1xf32, #tpu.memory_space<vmem>>, vector<8x1xf32>
    %161 = vector.broadcast %160 : vector<8x1xf32> to vector<8x256xf32>
    %162 = arith.addf %159, %161 : vector<8x256xf32>
    %cst_127 = arith.constant 0.000000e+00 : f32
    %163 = vector.broadcast %cst_127 : f32 to vector<8x256xf32>
    %164 = arith.cmpf ogt, %162, %163 : vector<8x256xf32>
    %cst_128 = arith.constant 2.000000e-01 : f32
    %165 = vector.broadcast %cst_128 : f32 to vector<8x256xf32>
    %166 = arith.mulf %165, %162 : vector<8x256xf32>
    %167 = arith.select %164, %162, %166 : vector<8x256xi1>, vector<8x256xf32>
    %168 = arith.index_cast %c1_i32 : i32 to index
    %c0_129 = arith.constant 0 : index
    %c0_130 = arith.constant 0 : index
    %169 = vector.load %arg3[%168, %c0_129, %c0_130] : memref<2x16x256xbf16, #tpu.memory_space<vmem>>, vector<1x16x256xbf16>
    %170 = vector.shape_cast %169 : vector<1x16x256xbf16> to vector<16x256xbf16>
    %171 = arith.extf %170 : vector<16x256xbf16> to vector<16x256xf32>
    %172 = vector.extract_strided_slice %171 {offsets = [0, 0], sizes = [8, 256], strides = [1, 1]} : vector<16x256xf32> to vector<8x256xf32>
    %173 = arith.mulf %172, %167 : vector<8x256xf32>
    %174 = vector.extract_strided_slice %171 {offsets = [8, 0], sizes = [8, 256], strides = [1, 1]} : vector<16x256xf32> to vector<8x256xf32>
    %175 = arith.addf %173, %174 : vector<8x256xf32>
    %176 = arith.truncf %175 : vector<8x256xf32> to vector<8x256xbf16>
    %c0_131 = arith.constant 0 : index
    %c128_132 = arith.constant 128 : index
    %177 = vector.load %arg11[%c0_131, %c128_132] : memref<8x512xbf16, #tpu.memory_space<vmem>>, vector<8x256xbf16>
    tpu.vector_store %arg11[%c0_131, %c128_132], %176 {strides = array<i32>} : memref<8x512xbf16, #tpu.memory_space<vmem>>, vector<8x256xbf16>,
    %c0_133 = arith.constant 0 : index
    %c126_134 = arith.constant 126 : index
    %178 = vector.load %arg11[%c0_133, %c126_134] : memref<8x512xbf16, #tpu.memory_space<vmem>>, vector<8x256xbf16>
    %c0_135 = arith.constant 0 : index
    %c130_136 = arith.constant 130 : index
    %179 = vector.load %arg11[%c0_135, %c130_136] : memref<8x512xbf16, #tpu.memory_space<vmem>>, vector<8x256xbf16>
    %c0_137 = arith.constant 0 : index
    %c0_138 = arith.constant 0 : index
    %c0_139 = arith.constant 0 : index
    %180 = vector.load %arg8[%c0_137, %c0_138, %c0_139] : memref<3x16x8xbf16, #tpu.memory_space<vmem>>, vector<1x16x8xbf16>
    %181 = vector.shape_cast %180 : vector<1x16x8xbf16> to vector<16x8xbf16>
    %cst_140 = arith.constant dense<0.000000e+00> : vector<16x256xf32>
    %182 = tpu.matmul %181, %178, %cst_140 {dimension_numbers = #tpu.dot_dimension_numbers<[1], [0], [0], [1], [0, 0, 1, 1], [], []>} : vector<16x8xbf16>, vector<8x256xbf16>, vector<16x256xf32> -> vector<16x256xf32>
    %c1_141 = arith.constant 1 : index
    %c0_142 = arith.constant 0 : index
    %c0_143 = arith.constant 0 : index
    %183 = vector.load %arg8[%c1_141, %c0_142, %c0_143] : memref<3x16x8xbf16, #tpu.memory_space<vmem>>, vector<1x16x8xbf16>
    %184 = vector.shape_cast %183 : vector<1x16x8xbf16> to vector<16x8xbf16>
    %cst_144 = arith.constant dense<0.000000e+00> : vector<16x256xf32>
    %185 = tpu.matmul %184, %176, %cst_144 {dimension_numbers = #tpu.dot_dimension_numbers<[1], [0], [0], [1], [0, 0, 1, 1], [], []>} : vector<16x8xbf16>, vector<8x256xbf16>, vector<16x256xf32> -> vector<16x256xf32>
    %186 = arith.addf %182, %185 : vector<16x256xf32>
    %c2_145 = arith.constant 2 : index
    %c0_146 = arith.constant 0 : index
    %c0_147 = arith.constant 0 : index
    %187 = vector.load %arg8[%c2_145, %c0_146, %c0_147] : memref<3x16x8xbf16, #tpu.memory_space<vmem>>, vector<1x16x8xbf16>
    %188 = vector.shape_cast %187 : vector<1x16x8xbf16> to vector<16x8xbf16>
    %cst_148 = arith.constant dense<0.000000e+00> : vector<16x256xf32>
    %189 = tpu.matmul %188, %179, %cst_148 {dimension_numbers = #tpu.dot_dimension_numbers<[1], [0], [0], [1], [0, 0, 1, 1], [], []>} : vector<16x8xbf16>, vector<8x256xbf16>, vector<16x256xf32> -> vector<16x256xf32>
    %190 = arith.addf %186, %189 : vector<16x256xf32>
    %c0_149 = arith.constant 0 : index
    %c0_150 = arith.constant 0 : index
    %191 = vector.load %arg9[%c0_149, %c0_150] : memref<16x1xf32, #tpu.memory_space<vmem>>, vector<16x1xf32>
    %192 = vector.broadcast %191 : vector<16x1xf32> to vector<16x256xf32>
    %193 = arith.addf %190, %192 : vector<16x256xf32>
    %cst_151 = arith.constant 0.000000e+00 : f32
    %194 = vector.broadcast %cst_151 : f32 to vector<16x256xf32>
    %195 = arith.cmpf ogt, %193, %194 : vector<16x256xf32>
    %cst_152 = arith.constant 2.000000e-01 : f32
    %196 = vector.broadcast %cst_152 : f32 to vector<16x256xf32>
    %197 = arith.mulf %196, %193 : vector<16x256xf32>
    %198 = arith.select %195, %193, %197 : vector<16x256xi1>, vector<16x256xf32>
    %199 = arith.index_cast %c1_i32 : i32 to index
    %c0_153 = arith.constant 0 : index
    %c0_154 = arith.constant 0 : index
    %200 = vector.load %arg10[%199, %c0_153, %c0_154] : memref<2x16x256xf32, #tpu.memory_space<vmem>>, vector<1x16x256xf32>
    %201 = vector.shape_cast %200 : vector<1x16x256xf32> to vector<16x256xf32>
    %202 = arith.addf %201, %198 : vector<16x256xf32>
    %203 = arith.index_cast %c1_i32 : i32 to index
    %c0_155 = arith.constant 0 : index
    %c0_156 = arith.constant 0 : index
    %204 = vector.load %arg10[%203, %c0_155, %c0_156] : memref<2x16x256xf32, #tpu.memory_space<vmem>>, vector<1x16x256xf32>
    %205 = vector.shape_cast %204 : vector<1x16x256xf32> to vector<16x256xf32>
    %206 = vector.shape_cast %202 : vector<16x256xf32> to vector<1x16x256xf32>
    tpu.vector_store %arg10[%203, %c0_155, %c0_156], %206 {strides = array<i32>} : memref<2x16x256xf32, #tpu.memory_space<vmem>>, vector<1x16x256xf32>,
    %c2_i32 = arith.constant 2 : i32
    return
  }
  func.func @transform_0(%arg0: i32) -> (i32, i32, i32) {
    %c0_i32 = arith.constant 0 : i32
    %c0_i32_0 = arith.constant 0 : i32
    %c0_i32_1 = arith.constant 0 : i32
    return %arg0, %c0_i32, %c0_i32_0 : i32, i32, i32
  }
  func.func @transform_1(%arg0: i32) -> (i32, i32, i32) {
    %c0_i32 = arith.constant 0 : i32
    %c0_i32_0 = arith.constant 0 : i32
    %c0_i32_1 = arith.constant 0 : i32
    return %arg0, %c0_i32, %c0_i32_0 : i32, i32, i32
  }
  func.func @transform_2(%arg0: i32) -> (i32, i32, i32) {
    %c0_i32 = arith.constant 0 : i32
    %c0_i32_0 = arith.constant 0 : i32
    %c0_i32_1 = arith.constant 0 : i32
    return %arg0, %c0_i32, %c0_i32_0 : i32, i32, i32
  }
  func.func @transform_3(%arg0: i32) -> (i32, i32, i32) {
    %c0_i32 = arith.constant 0 : i32
    %c0_i32_0 = arith.constant 0 : i32
    %c0_i32_1 = arith.constant 0 : i32
    %c0_i32_2 = arith.constant 0 : i32
    return %c0_i32, %c0_i32_0, %c0_i32_1 : i32, i32, i32
  }
  func.func @transform_4(%arg0: i32) -> (i32, i32) {
    %c0_i32 = arith.constant 0 : i32
    %c0_i32_0 = arith.constant 0 : i32
    %c0_i32_1 = arith.constant 0 : i32
    return %c0_i32, %c0_i32_0 : i32, i32
  }
  func.func @transform_5(%arg0: i32) -> (i32, i32, i32) {
    %c0_i32 = arith.constant 0 : i32
    %c0_i32_0 = arith.constant 0 : i32
    %c0_i32_1 = arith.constant 0 : i32
    %c0_i32_2 = arith.constant 0 : i32
    return %c0_i32, %c0_i32_0, %c0_i32_1 : i32, i32, i32
  }
  func.func @transform_6(%arg0: i32) -> (i32, i32) {
    %c0_i32 = arith.constant 0 : i32
    %c0_i32_0 = arith.constant 0 : i32
    %c0_i32_1 = arith.constant 0 : i32
    return %c0_i32, %c0_i32_0 : i32, i32
  }
  func.func @transform_7(%arg0: i32) -> (i32, i32, i32) {
    %c0_i32 = arith.constant 0 : i32
    %c0_i32_0 = arith.constant 0 : i32
    %c0_i32_1 = arith.constant 0 : i32
    %c0_i32_2 = arith.constant 0 : i32
    return %c0_i32, %c0_i32_0, %c0_i32_1 : i32, i32, i32
  }
  func.func @transform_8(%arg0: i32) -> (i32, i32) {
    %c0_i32 = arith.constant 0 : i32
    %c0_i32_0 = arith.constant 0 : i32
    %c0_i32_1 = arith.constant 0 : i32
    return %c0_i32, %c0_i32_0 : i32, i32
  }
  func.func @transform_9(%arg0: i32) -> (i32, i32, i32) {
    %c0_i32 = arith.constant 0 : i32
    %c0_i32_0 = arith.constant 0 : i32
    %c0_i32_1 = arith.constant 0 : i32
    return %arg0, %c0_i32, %c0_i32_0 : i32, i32, i32
  }
}

</mosaic_0001>

<llo_original>
// kernel: tpu_custom_call.1
$region0: #{tpu_custom_call.1}
  #allocation0 [shape = 'u32[]', space=smem, size = 0x4, offset = 0x4, fixed_abs, tag = 'smem constant byte address 0x4 - core index']
  #allocation1 [shape = 'u32[144,128]{1,0:T(1,128)}', space=vmem, size = 0x12000, scoped, tag = 'internal scratch']
  #allocation2 [shape = 'bf16[8,512]{1,0:T(8,128)(2,1)}', space=vmem, size = 0x2000, scoped, tag = 'scratch operand']
  #allocation3 [shape = 'bf16[8,512]{1,0:T(8,128)(2,1)}', space=vmem, size = 0x2000, scoped, tag = 'scratch operand']
  %s0 = inlined_call_operand.vmem [shape: bf16[2,8,256], index: 0, kind: input, shape index: {}]
  %s1 = inlined_call_operand.vmem [shape: bf16[2,16,256], index: 1, kind: input, shape index: {}]
  %s2 = inlined_call_operand.vmem [shape: bf16[2,16,256], index: 2, kind: input, shape index: {}]
  %s3 = inlined_call_operand.vmem [shape: bf16[3,16,8], index: 3, kind: input, shape index: {}]
  %s4 = inlined_call_operand.vmem [shape: f32[16,1], index: 4, kind: input, shape index: {}]
  %s5 = inlined_call_operand.vmem [shape: bf16[3,8,8], index: 5, kind: input, shape index: {}]
  %s6 = inlined_call_operand.vmem [shape: f32[8,1], index: 6, kind: input, shape index: {}]
  %s7 = inlined_call_operand.vmem [shape: bf16[3,16,8], index: 7, kind: input, shape index: {}]
  %s8 = inlined_call_operand.vmem [shape: f32[16,1], index: 8, kind: input, shape index: {}]
  %s9 = inlined_call_operand.hbm [shape: f32[2,16,256], index: 9, kind: output, shape index: {}]
  %s10 = sld [smem:[#allocation0]]
  $region46: #{tpu_custom_call.1} parent=0
    _
  %s12 = ssub.s32 1, %s10
  %s13 = scalar_select 0, %s12, %s10
  $region1: #{tpu_custom_call.1} parent=0
    #allocation4 [shape = 'u8[32768]{0}', space=vmem, size = 0x8000, scoped, tag = 'output window, operand 0, single buffered']
    #allocation5 [shape = 's32[1]{0}', space=sflag, size = 0x4, scoped, tag = 'scoped memory for tpu_custom_call.1']
    %14 = vsyncpa [#allocation5], 0
    // Predicated region
    $region2: #{tpu_custom_call.1} parent=1 // pred_check
      _
    $region3: #{tpu_custom_call.1} parent=1 // pred_check_branch
      %16 = sbr.rel (0) target = $region5
    $region4: #{tpu_custom_call.1} parent=1 // pred_region
      _
    $region5: #{tpu_custom_call.1} parent=1 // pred_fallthru
      _
    // Predicated region
    $region6: #{tpu_custom_call.1} parent=1 // pred_check
      _
    $region7: #{tpu_custom_call.1} parent=1 // pred_check_branch
      %18 = sbr.rel (0) target = $region9
    $region8: #{tpu_custom_call.1} parent=1 // pred_region
      _
    $region9: #{tpu_custom_call.1} parent=1 // pred_fallthru
      _
    // Predicated region
    $region10: #{tpu_custom_call.1} parent=1 // pred_check
      _
    $region11: #{tpu_custom_call.1} parent=1 // pred_check_branch
      %20 = sbr.rel (0) target = $region13
    $region12: #{tpu_custom_call.1} parent=1 // pred_region
      _
    $region13: #{tpu_custom_call.1} parent=1 // pred_fallthru
      _
    // Predicated region
    $region14: #{tpu_custom_call.1} parent=1 // pred_check
      _
    $region15: #{tpu_custom_call.1} parent=1 // pred_check_branch
      %22 = sbr.rel (0) target = $region17
    $region16: #{tpu_custom_call.1} parent=1 // pred_region
      _
    $region17: #{tpu_custom_call.1} parent=1 // pred_fallthru
      _
    // Predicated region
    $region18: #{tpu_custom_call.1} parent=1 // pred_check
      _
    $region19: #{tpu_custom_call.1} parent=1 // pred_check_branch
      %24 = sbr.rel (0) target = $region21
    $region20: #{tpu_custom_call.1} parent=1 // pred_region
      _
    $region21: #{tpu_custom_call.1} parent=1 // pred_fallthru
      _
    // Predicated region
    $region22: #{tpu_custom_call.1} parent=1 // pred_check
      _
    $region23: #{tpu_custom_call.1} parent=1 // pred_check_branch
      %26 = sbr.rel (0) target = $region25
    $region24: #{tpu_custom_call.1} parent=1 // pred_region
      _
    $region25: #{tpu_custom_call.1} parent=1 // pred_fallthru
      _
    // Predicated region
    $region26: #{tpu_custom_call.1} parent=1 // pred_check
      _
    $region27: #{tpu_custom_call.1} parent=1 // pred_check_branch
      %28 = sbr.rel (0) target = $region29
    $region28: #{tpu_custom_call.1} parent=1 // pred_region
      _
    $region29: #{tpu_custom_call.1} parent=1 // pred_fallthru
      _
    // Predicated region
    $region30: #{tpu_custom_call.1} parent=1 // pred_check
      _
    $region31: #{tpu_custom_call.1} parent=1 // pred_check_branch
      %30 = sbr.rel (0) target = $region33
    $region32: #{tpu_custom_call.1} parent=1 // pred_region
      _
    $region33: #{tpu_custom_call.1} parent=1 // pred_fallthru
      _
    // Predicated region
    $region34: #{tpu_custom_call.1} parent=1 // pred_check
      _
    $region35: #{tpu_custom_call.1} parent=1 // pred_check_branch
      %32 = sbr.rel (0) target = $region37
    $region36: #{tpu_custom_call.1} parent=1 // pred_region
      _
    $region37: #{tpu_custom_call.1} parent=1 // pred_fallthru
      _
    %vm34 = vcmask 1044464
    %35 = vst.msk [vmem:[#allocation2] sm:$0xf] %vm34, 0
    %vm36 = vcmask 11264
    %37 = vst.msk [vmem:[#allocation2 + $0xc] sm:$0xf] %vm36, 0
    %38 = vst.msk [vmem:[#allocation3] sm:$0xf] %vm34, 0
    %39 = vst.msk [vmem:[#allocation3 + $0xc] sm:$0xf] %vm36, 0
    %v40 = vld [vmem:[%s0] sm:$0xff]
    %v41 = vunpack.c.l.bf16 %v40
    %v42 = vunpack.c.h.bf16 %v40
    %43 = vst [vmem:[#allocation2 + $0x4] sm:$0xff] %v40
    %v44 = vld [vmem:[#allocation2] sm:$0xff]
    %v45 = vld [vmem:[#allocation2 + $0x8] sm:$0xf]
    %v46 = vld [vmem:[#allocation2 + $0x4] sm:$0xff]
    %v47 = vld [vmem:[#allocation2 + $0xc] sm:$0xf]
    %v48 = vld [vmem:[%s3] sm:$0xf]
    %v49 = vld [vmem:[%s3 + $0x4] sm:$0xf]
    %s50 = scalar_lea.vmem %s3, 8
    %v51 = vld [vmem:[%s50] sm:$0xf]
    %v52 = vld [vmem:[%s50 + $0x4] sm:$0xf]
    %v55 = vunpack.c.l.b16 %v51
    %v56 = vunpack.c.l.b16 %v52
    %v57 = vpack.c.b16 %v56, %v55
    %v59 = vunpack.c.l.b16 %v40
    %v60 = vunpack.c.h.b16 %v40
    %v61 = vpack.c.b16 %v59, %v59
    %v62 = vpack.c.b16 %v60, %v60
    %vm63 = vcmask 64512
    %v65 = vsel %vm63, %v57, 0
    %vm67 = vcmask 1043456
    %v69 = vsel %vm67, %v61, 0
    %v72 = vsel %vm67, %v62, 0
    %74 = vmatprep.subr.bf16.mxu0 %v72
    %75 = vmatpush1.bf16.msra.mxu0 %v69
    %76 = vmatprep.subr.bf16.mxu0 0
    %77 = vmatpush1.bf16.msra.mxu0 0
    %78 = vmatprep.subr.bf16.mxu0 0
    %79 = vmatpush1.bf16.msra.mxu0 0
    %80 = vmatprep.subr.bf16.mxu0 0
    %81 = vmatpush1.bf16.msra.mxu0 0
    %82 = vmatprep.subr.bf16.mxu0 0
    %83 = vmatpush1.bf16.msra.mxu0 0
    %84 = vmatprep.subr.bf16.mxu0 0
    %85 = vmatpush1.bf16.msra.mxu0 0
    %86 = vmatprep.subr.bf16.mxu0 0
    %87 = vmatpush1.bf16.msra.mxu0 0
    %88 = vmatprep.subr.bf16.mxu0 0
    %89 = vmatpush1.bf16.msra.mxu0 0
    %90 = vmatprep.subr.bf16.mxu0 0
    %91 = vmatpush1.bf16.msra.mxu0 0
    %92 = vmatprep.subr.bf16.mxu0 0
    %93 = vmatpush1.bf16.msra.mxu0 0
    %94 = vmatprep.subr.bf16.mxu0 0
    %95 = vmatpush1.bf16.msra.mxu0 0
    %96 = vmatprep.subr.bf16.mxu0 0
    %97 = vmatpush1.bf16.msra.mxu0 0
    %98 = vmatprep.subr.bf16.mxu0 0
    %99 = vmatpush1.bf16.msra.mxu0 0
    %100 = vmatprep.subr.bf16.mxu0 0
    %101 = vmatpush1.bf16.msra.mxu0 0
    %102 = vmatprep.subr.bf16.mxu0 0
    %103 = vmatpush1.bf16.msra.mxu0 0
    %104 = vmatprep.subr.bf16.mxu0 0
    %105 = vmatpush1.bf16.msra.mxu0 0
    %106 = vmatprep.mubr.bf16.mxu0 0
    %107 = vmatmul.mubr.bf16.gmra.mrb[0].mxu0 %v65
    %v108 = vpop.f32.mrb[0].mxu0
    %v109 = vadd.f32 0.0, %v108
    %v110 = vpop.f32.mrb[0].mxu0
    %v111 = vadd.f32 0.0, %v110
    %v112 = vpop.f32.mrb[0].mxu0
    %v113 = vadd.f32 0.0, %v112
    %v114 = vpop.f32.mrb[0].mxu0
    %v115 = vadd.f32 0.0, %v114
    %116 = vdwg.mxu0
    %v119 = vunpack.c.l.b16 %v48
    %v120 = vunpack.c.l.b16 %v49
    %v121 = vpack.c.b16 %v120, %v119
    %v124 = vunpack.c.l.b16 %v44
    %v125 = vunpack.c.h.b16 %v44
    %v126 = vunpack.c.l.b16 %v45
    %v127 = vpack.c.b16 %v124, %v124
    %v128 = vpack.c.b16 %v125, %v125
    %v129 = vpack.c.b16 %v126, %v126
    %130 = vrot.lane.b32.xlu0 %v127, 2
    %v131 = vpop.permute.xlu0 %130
    %132 = vrot.lane.b32.xlu0 %v128, 2
    %v133 = vpop.permute.xlu0 %132
    %134 = vrot.lane.b32.xlu0 %v129, 2
    %v135 = vpop.permute.xlu0 %134
    %vm136 = vcmask 15360
    %v137 = vsel %vm136, %v131, %v133
    %v138 = vsel %vm136, %v133, %v135
    %v140 = vsel %vm63, %v121, 0
    %v143 = vsel %vm67, %v137, 0
    %v146 = vsel %vm67, %v138, 0
    %148 = vmatprep.subr.bf16.mxu0 %v146
    %149 = vmatpush1.bf16.msra.mxu0 %v143
    %150 = vmatprep.subr.bf16.mxu0 0
    %151 = vmatpush1.bf16.msra.mxu0 0
    %152 = vmatprep.subr.bf16.mxu0 0
    %153 = vmatpush1.bf16.msra.mxu0 0
    %154 = vmatprep.subr.bf16.mxu0 0
    %155 = vmatpush1.bf16.msra.mxu0 0
    %156 = vmatprep.subr.bf16.mxu0 0
    %157 = vmatpush1.bf16.msra.mxu0 0
    %158 = vmatprep.subr.bf16.mxu0 0
    %159 = vmatpush1.bf16.msra.mxu0 0
    %160 = vmatprep.subr.bf16.mxu0 0
    %161 = vmatpush1.bf16.msra.mxu0 0
    %162 = vmatprep.subr.bf16.mxu0 0
    %163 = vmatpush1.bf16.msra.mxu0 0
    %164 = vmatprep.subr.bf16.mxu0 0
    %165 = vmatpush1.bf16.msra.mxu0 0
    %166 = vmatprep.subr.bf16.mxu0 0
    %167 = vmatpush1.bf16.msra.mxu0 0
    %168 = vmatprep.subr.bf16.mxu0 0
    %169 = vmatpush1.bf16.msra.mxu0 0
    %170 = vmatprep.subr.bf16.mxu0 0
    %171 = vmatpush1.bf16.msra.mxu0 0
    %172 = vmatprep.subr.bf16.mxu0 0
    %173 = vmatpush1.bf16.msra.mxu0 0
    %174 = vmatprep.subr.bf16.mxu0 0
    %175 = vmatpush1.bf16.msra.mxu0 0
    %176 = vmatprep.subr.bf16.mxu0 0
    %177 = vmatpush1.bf16.msra.mxu0 0
    %178 = vmatprep.subr.bf16.mxu0 0
    %179 = vmatpush1.bf16.msra.mxu0 0
    %180 = vmatprep.mubr.bf16.mxu0 0
    %181 = vmatmul.mubr.bf16.gmra.mrb[0].mxu0 %v140
    %v182 = vpop.f32.mrb[0].mxu0
    %v183 = vadd.f32 %v109, %v182
    %v184 = vpop.f32.mrb[0].mxu0
    %v185 = vadd.f32 %v111, %v184
    %v186 = vpop.f32.mrb[0].mxu0
    %v187 = vadd.f32 %v113, %v186
    %v188 = vpop.f32.mrb[0].mxu0
    %v189 = vadd.f32 %v115, %v188
    %190 = vdwg.mxu0
    %s191 = scalar_lea.vmem %s3, 16
    %v192 = vld [vmem:[%s191] sm:$0xf]
    %v193 = vld [vmem:[%s191 + $0x4] sm:$0xf]
    %v196 = vunpack.c.l.b16 %v192
    %v197 = vunpack.c.l.b16 %v193
    %v198 = vpack.c.b16 %v197, %v196
    %v201 = vunpack.c.l.b16 %v46
    %v202 = vunpack.c.h.b16 %v46
    %v203 = vunpack.c.l.b16 %v47
    %v204 = vpack.c.b16 %v201, %v201
    %v205 = vpack.c.b16 %v202, %v202
    %v206 = vpack.c.b16 %v203, %v203
    %207 = vrot.lane.b32.xlu0 %v204, 126
    %v208 = vpop.permute.xlu0 %207
    %209 = vrot.lane.b32.xlu0 %v205, 126
    %v210 = vpop.permute.xlu0 %209
    %211 = vrot.lane.b32.xlu0 %v206, 126
    %v212 = vpop.permute.xlu0 %211
    %vm213 = vcmask 1031168
    %v214 = vsel %vm213, %v208, %v210
    %v215 = vsel %vm213, %v210, %v212
    %v217 = vsel %vm63, %v198, 0
    %v220 = vsel %vm67, %v214, 0
    %v223 = vsel %vm67, %v215, 0
    %225 = vmatprep.subr.bf16.mxu0 %v223
    %226 = vmatpush1.bf16.msra.mxu0 %v220
    %227 = vmatprep.subr.bf16.mxu0 0
    %228 = vmatpush1.bf16.msra.mxu0 0
    %229 = vmatprep.subr.bf16.mxu0 0
    %230 = vmatpush1.bf16.msra.mxu0 0
    %231 = vmatprep.subr.bf16.mxu0 0
    %232 = vmatpush1.bf16.msra.mxu0 0
    %233 = vmatprep.subr.bf16.mxu0 0
    %234 = vmatpush1.bf16.msra.mxu0 0
    %235 = vmatprep.subr.bf16.mxu0 0
    %236 = vmatpush1.bf16.msra.mxu0 0
    %237 = vmatprep.subr.bf16.mxu0 0
    %238 = vmatpush1.bf16.msra.mxu0 0
    %239 = vmatprep.subr.bf16.mxu0 0
    %240 = vmatpush1.bf16.msra.mxu0 0
    %241 = vmatprep.subr.bf16.mxu0 0
    %242 = vmatpush1.bf16.msra.mxu0 0
    %243 = vmatprep.subr.bf16.mxu0 0
    %244 = vmatpush1.bf16.msra.mxu0 0
    %245 = vmatprep.subr.bf16.mxu0 0
    %246 = vmatpush1.bf16.msra.mxu0 0
    %247 = vmatprep.subr.bf16.mxu0 0
    %248 = vmatpush1.bf16.msra.mxu0 0
    %249 = vmatprep.subr.bf16.mxu0 0
    %250 = vmatpush1.bf16.msra.mxu0 0
    %251 = vmatprep.subr.bf16.mxu0 0
    %252 = vmatpush1.bf16.msra.mxu0 0
    %253 = vmatprep.subr.bf16.mxu0 0
    %254 = vmatpush1.bf16.msra.mxu0 0
    %255 = vmatprep.subr.bf16.mxu0 0
    %256 = vmatpush1.bf16.msra.mxu0 0
    %257 = vmatprep.mubr.bf16.mxu0 0
    %258 = vmatmul.mubr.bf16.gmra.mrb[0].mxu0 %v217
    %v259 = vpop.f32.mrb[0].mxu0
    %v260 = vadd.f32 0.0, %v259
    %v261 = vpop.f32.mrb[0].mxu0
    %v262 = vadd.f32 0.0, %v261
    %v263 = vpop.f32.mrb[0].mxu0
    %v264 = vadd.f32 0.0, %v263
    %v265 = vpop.f32.mrb[0].mxu0
    %v266 = vadd.f32 0.0, %v265
    %267 = vdwg.mxu0
    %v268 = vadd.f32 %v183, %v260
    %v269 = vadd.f32 %v185, %v262
    %v270 = vadd.f32 %v187, %v264
    %v271 = vadd.f32 %v189, %v266
    %v272 = vld [vmem:[%s4] sm:$0xff]
    %v273 = vld [vmem:[%s4 + $0x8] sm:$0xff]
    %275 = vset.pattern.permute.xlu0 0
    %276 = vperm.xlu0 %275, %v272
    %v277 = vpop.permute.xlu0 %276
    %280 = vset.pattern.permute.xlu0 0
    %281 = vperm.xlu0 %280, %v273
    %v282 = vpop.permute.xlu0 %281
    %v284 = vadd.f32 %v268, %v277
    %v285 = vadd.f32 %v269, %v277
    %v286 = vadd.f32 %v270, %v282
    %v287 = vadd.f32 %v271, %v282
    %vm288 = vcmp.gt.f32.partialorder %v284, 0.0
    %vm289 = vcmp.gt.f32.partialorder %v285, 0.0
    %vm290 = vcmp.gt.f32.partialorder %v286, 0.0
    %vm291 = vcmp.gt.f32.partialorder %v287, 0.0
    %v292 = vmul.f32 %v284, 0.2
    %v293 = vmul.f32 %v285, 0.2
    %v294 = vmul.f32 %v286, 0.2
    %v295 = vmul.f32 %v287, 0.2
    %v296 = vsel %vm288, %v284, %v292
    %v297 = vsel %vm289, %v285, %v293
    %v298 = vsel %vm290, %v286, %v294
    %v299 = vsel %vm291, %v287, %v295
    %300 = vst [vmem:[#allocation4] sm:$0xff] %v296
    %301 = vst [vmem:[#allocation4 + $0x8] sm:$0xff] %v297
    %302 = vst [vmem:[#allocation4 + $0x10] sm:$0xff] %v298
    %303 = vst [vmem:[#allocation4 + $0x18] sm:$0xff] %v299
    %v304 = vld [vmem:[%s1] sm:$0xff]
    %v305 = vld [vmem:[%s1 + $0x8] sm:$0xff]
    %v306 = vunpack.c.l.bf16 %v304
    %v307 = vunpack.c.h.bf16 %v304
    %v308 = vunpack.c.l.bf16 %v305
    %v309 = vunpack.c.h.bf16 %v305
    %v310 = vmul.f32 %v306, %v41
    %v311 = vmul.f32 %v307, %v42
    %v312 = vadd.f32 %v310, %v308
    %v313 = vadd.f32 %v311, %v309
    %v314 = vpack.c.bf16 %v312, %v312
    %v315 = vpack.c.bf16 %v313, %v313
    %v318 = vunpack.c.l.b16 %v314
    %v319 = vunpack.c.l.b16 %v315
    %v320 = vpack.c.b16 %v319, %v318
    %322 = vst [vmem:[#allocation3 + $0x4] sm:$0xff] %v320
    %v323 = vld [vmem:[#allocation3] sm:$0xff]
    %v324 = vld [vmem:[#allocation3 + $0x8] sm:$0xf]
    %v325 = vld [vmem:[#allocation3 + $0x4] sm:$0xff]
    %v326 = vld [vmem:[#allocation3 + $0xc] sm:$0xf]
    %v327 = vld [vmem:[%s5] sm:$0xf]
    %s328 = scalar_lea.vmem %s5, 4
    %v329 = vld [vmem:[%s328] sm:$0xf]
    %v331 = vsel %vm63, %v329, 0
    %v334 = vsel %vm67, %v314, 0
    %v337 = vsel %vm67, %v315, 0
    %339 = vmatprep.subr.bf16.mxu0 %v337
    %340 = vmatpush1.bf16.msra.mxu0 %v334
    %341 = vmatprep.subr.bf16.mxu0 0
    %342 = vmatpush1.bf16.msra.mxu0 0
    %343 = vmatprep.subr.bf16.mxu0 0
    %344 = vmatpush1.bf16.msra.mxu0 0
    %345 = vmatprep.subr.bf16.mxu0 0
    %346 = vmatpush1.bf16.msra.mxu0 0
    %347 = vmatprep.subr.bf16.mxu0 0
    %348 = vmatpush1.bf16.msra.mxu0 0
    %349 = vmatprep.subr.bf16.mxu0 0
    %350 = vmatpush1.bf16.msra.mxu0 0
    %351 = vmatprep.subr.bf16.mxu0 0
    %352 = vmatpush1.bf16.msra.mxu0 0
    %353 = vmatprep.subr.bf16.mxu0 0
    %354 = vmatpush1.bf16.msra.mxu0 0
    %355 = vmatprep.subr.bf16.mxu0 0
    %356 = vmatpush1.bf16.msra.mxu0 0
    %357 = vmatprep.subr.bf16.mxu0 0
    %358 = vmatpush1.bf16.msra.mxu0 0
    %359 = vmatprep.subr.bf16.mxu0 0
    %360 = vmatpush1.bf16.msra.mxu0 0
    %361 = vmatprep.subr.bf16.mxu0 0
    %362 = vmatpush1.bf16.msra.mxu0 0
    %363 = vmatprep.subr.bf16.mxu0 0
    %364 = vmatpush1.bf16.msra.mxu0 0
    %365 = vmatprep.subr.bf16.mxu0 0
    %366 = vmatpush1.bf16.msra.mxu0 0
    %367 = vmatprep.subr.bf16.mxu0 0
    %368 = vmatpush1.bf16.msra.mxu0 0
    %369 = vmatprep.subr.bf16.mxu0 0
    %370 = vmatpush1.bf16.msra.mxu0 0
    %371 = vmatprep.mubr.bf16.mxu0 0
    %372 = vmatmul.mubr.bf16.gmra.mrb[0].mxu0 %v331
    %v373 = vpop.f32.mrb[0].mxu0
    %v374 = vadd.f32 0.0, %v373
    %v375 = vpop.f32.mrb[0].mxu0
    %v376 = vadd.f32 0.0, %v375
    %v377 = vpop.f32.mrb[0].mxu0
    %v378 = vpop.f32.mrb[0].mxu0
    %379 = vdwg.mxu0
    %v382 = vunpack.c.l.b16 %v323
    %v383 = vunpack.c.h.b16 %v323
    %v384 = vunpack.c.l.b16 %v324
    %v385 = vpack.c.b16 %v382, %v382
    %v386 = vpack.c.b16 %v383, %v383
    %v387 = vpack.c.b16 %v384, %v384
    %388 = vrot.lane.b32.xlu0 %v385, 2
    %v389 = vpop.permute.xlu0 %388
    %390 = vrot.lane.b32.xlu0 %v386, 2
    %v391 = vpop.permute.xlu0 %390
    %392 = vrot.lane.b32.xlu0 %v387, 2
    %v393 = vpop.permute.xlu0 %392
    %v394 = vsel %vm136, %v389, %v391
    %v395 = vsel %vm136, %v391, %v393
    %v397 = vsel %vm63, %v327, 0
    %v400 = vsel %vm67, %v394, 0
    %v403 = vsel %vm67, %v395, 0
    %405 = vmatprep.subr.bf16.mxu0 %v403
    %406 = vmatpush1.bf16.msra.mxu0 %v400
    %407 = vmatprep.subr.bf16.mxu0 0
    %408 = vmatpush1.bf16.msra.mxu0 0
    %409 = vmatprep.subr.bf16.mxu0 0
    %410 = vmatpush1.bf16.msra.mxu0 0
    %411 = vmatprep.subr.bf16.mxu0 0
    %412 = vmatpush1.bf16.msra.mxu0 0
    %413 = vmatprep.subr.bf16.mxu0 0
    %414 = vmatpush1.bf16.msra.mxu0 0
    %415 = vmatprep.subr.bf16.mxu0 0
    %416 = vmatpush1.bf16.msra.mxu0 0
    %417 = vmatprep.subr.bf16.mxu0 0
    %418 = vmatpush1.bf16.msra.mxu0 0
    %419 = vmatprep.subr.bf16.mxu0 0
    %420 = vmatpush1.bf16.msra.mxu0 0
    %421 = vmatprep.subr.bf16.mxu0 0
    %422 = vmatpush1.bf16.msra.mxu0 0
    %423 = vmatprep.subr.bf16.mxu0 0
    %424 = vmatpush1.bf16.msra.mxu0 0
    %425 = vmatprep.subr.bf16.mxu0 0
    %426 = vmatpush1.bf16.msra.mxu0 0
    %427 = vmatprep.subr.bf16.mxu0 0
    %428 = vmatpush1.bf16.msra.mxu0 0
    %429 = vmatprep.subr.bf16.mxu0 0
    %430 = vmatpush1.bf16.msra.mxu0 0
    %431 = vmatprep.subr.bf16.mxu0 0
    %432 = vmatpush1.bf16.msra.mxu0 0
    %433 = vmatprep.subr.bf16.mxu0 0
    %434 = vmatpush1.bf16.msra.mxu0 0
    %435 = vmatprep.subr.bf16.mxu0 0
    %436 = vmatpush1.bf16.msra.mxu0 0
    %437 = vmatprep.mubr.bf16.mxu0 0
    %438 = vmatmul.mubr.bf16.gmra.mrb[0].mxu0 %v397
    %v439 = vpop.f32.mrb[0].mxu0
    %v440 = vadd.f32 %v374, %v439
    %v441 = vpop.f32.mrb[0].mxu0
    %v442 = vadd.f32 %v376, %v441
    %v443 = vpop.f32.mrb[0].mxu0
    %v444 = vpop.f32.mrb[0].mxu0
    %445 = vdwg.mxu0
    %s446 = scalar_lea.vmem %s5, 8
    %v447 = vld [vmem:[%s446] sm:$0xf]
    %v450 = vunpack.c.l.b16 %v325
    %v451 = vunpack.c.h.b16 %v325
    %v452 = vunpack.c.l.b16 %v326
    %v453 = vpack.c.b16 %v450, %v450
    %v454 = vpack.c.b16 %v451, %v451
    %v455 = vpack.c.b16 %v452, %v452
    %456 = vrot.lane.b32.xlu0 %v453, 126
    %v457 = vpop.permute.xlu0 %456
    %458 = vrot.lane.b32.xlu0 %v454, 126
    %v459 = vpop.permute.xlu0 %458
    %460 = vrot.lane.b32.xlu0 %v455, 126
    %v461 = vpop.permute.xlu0 %460
    %v462 = vsel %vm213, %v457, %v459
    %v463 = vsel %vm213, %v459, %v461
    %v465 = vsel %vm63, %v447, 0
    %v468 = vsel %vm67, %v462, 0
    %v471 = vsel %vm67, %v463, 0
    %473 = vmatprep.subr.bf16.mxu0 %v471
    %474 = vmatpush1.bf16.msra.mxu0 %v468
    %475 = vmatprep.subr.bf16.mxu0 0
    %476 = vmatpush1.bf16.msra.mxu0 0
    %477 = vmatprep.subr.bf16.mxu0 0
    %478 = vmatpush1.bf16.msra.mxu0 0
    %479 = vmatprep.subr.bf16.mxu0 0
    %480 = vmatpush1.bf16.msra.mxu0 0
    %481 = vmatprep.subr.bf16.mxu0 0
    %482 = vmatpush1.bf16.msra.mxu0 0
    %483 = vmatprep.subr.bf16.mxu0 0
    %484 = vmatpush1.bf16.msra.mxu0 0
    %485 = vmatprep.subr.bf16.mxu0 0
    %486 = vmatpush1.bf16.msra.mxu0 0
    %487 = vmatprep.subr.bf16.mxu0 0
    %488 = vmatpush1.bf16.msra.mxu0 0
    %489 = vmatprep.subr.bf16.mxu0 0
    %490 = vmatpush1.bf16.msra.mxu0 0
    %491 = vmatprep.subr.bf16.mxu0 0
    %492 = vmatpush1.bf16.msra.mxu0 0
    %493 = vmatprep.subr.bf16.mxu0 0
    %494 = vmatpush1.bf16.msra.mxu0 0
    %495 = vmatprep.subr.bf16.mxu0 0
    %496 = vmatpush1.bf16.msra.mxu0 0
    %497 = vmatprep.subr.bf16.mxu0 0
    %498 = vmatpush1.bf16.msra.mxu0 0
    %499 = vmatprep.subr.bf16.mxu0 0
    %500 = vmatpush1.bf16.msra.mxu0 0
    %501 = vmatprep.subr.bf16.mxu0 0
    %502 = vmatpush1.bf16.msra.mxu0 0
    %503 = vmatprep.subr.bf16.mxu0 0
    %504 = vmatpush1.bf16.msra.mxu0 0
    %505 = vmatprep.mubr.bf16.mxu0 0
    %506 = vmatmul.mubr.bf16.gmra.mrb[0].mxu0 %v465
    %v507 = vpop.f32.mrb[0].mxu0
    %v508 = vadd.f32 0.0, %v507
    %v509 = vpop.f32.mrb[0].mxu0
    %v510 = vadd.f32 0.0, %v509
    %v511 = vpop.f32.mrb[0].mxu0
    %v512 = vpop.f32.mrb[0].mxu0
    %513 = vdwg.mxu0
    %v514 = vadd.f32 %v440, %v508
    %v515 = vadd.f32 %v442, %v510
    %v516 = vld [vmem:[%s6] sm:$0xff]
    %518 = vset.pattern.permute.xlu0 0
    %519 = vperm.xlu0 %518, %v516
    %v520 = vpop.permute.xlu0 %519
    %v522 = vadd.f32 %v514, %v520
    %v523 = vadd.f32 %v515, %v520
    %vm524 = vcmp.gt.f32.partialorder %v522, 0.0
    %vm525 = vcmp.gt.f32.partialorder %v523, 0.0
    %v526 = vmul.f32 %v522, 0.2
    %v527 = vmul.f32 %v523, 0.2
    %v528 = vsel %vm524, %v522, %v526
    %v529 = vsel %vm525, %v523, %v527
    %v530 = vld [vmem:[%s2] sm:$0xff]
    %v531 = vld [vmem:[%s2 + $0x8] sm:$0xff]
    %v532 = vunpack.c.l.bf16 %v530
    %v533 = vunpack.c.h.bf16 %v530
    %v534 = vunpack.c.l.bf16 %v531
    %v535 = vunpack.c.h.bf16 %v531
    %v536 = vmul.f32 %v532, %v528
    %v537 = vmul.f32 %v533, %v529
    %v538 = vadd.f32 %v536, %v534
    %v539 = vadd.f32 %v537, %v535
    %v540 = vpack.c.bf16 %v538, %v538
    %v541 = vpack.c.bf16 %v539, %v539
    %v544 = vunpack.c.l.b16 %v540
    %v545 = vunpack.c.l.b16 %v541
    %v546 = vpack.c.b16 %v545, %v544
    %548 = vst [vmem:[#allocation2 + $0x4] sm:$0xff] %v546
    %v549 = vld [vmem:[#allocation2] sm:$0xff]
    %v550 = vld [vmem:[#allocation2 + $0x8] sm:$0xf]
    %v551 = vld [vmem:[#allocation2 + $0x4] sm:$0xff]
    %v552 = vld [vmem:[#allocation2 + $0xc] sm:$0xf]
    %v553 = vld [vmem:[%s7] sm:$0xf]
    %v554 = vld [vmem:[%s7 + $0x4] sm:$0xf]
    %s555 = scalar_lea.vmem %s7, 8
    %v556 = vld [vmem:[%s555] sm:$0xf]
    %v557 = vld [vmem:[%s555 + $0x4] sm:$0xf]
    %v560 = vunpack.c.l.b16 %v556
    %v561 = vunpack.c.l.b16 %v557
    %v562 = vpack.c.b16 %v561, %v560
    %v564 = vsel %vm63, %v562, 0
    %v567 = vsel %vm67, %v540, 0
    %v570 = vsel %vm67, %v541, 0
    %572 = vmatprep.subr.bf16.mxu0 %v570
    %573 = vmatpush1.bf16.msra.mxu0 %v567
    %574 = vmatprep.subr.bf16.mxu0 0
    %575 = vmatpush1.bf16.msra.mxu0 0
    %576 = vmatprep.subr.bf16.mxu0 0
    %577 = vmatpush1.bf16.msra.mxu0 0
    %578 = vmatprep.subr.bf16.mxu0 0
    %579 = vmatpush1.bf16.msra.mxu0 0
    %580 = vmatprep.subr.bf16.mxu0 0
    %581 = vmatpush1.bf16.msra.mxu0 0
    %582 = vmatprep.subr.bf16.mxu0 0
    %583 = vmatpush1.bf16.msra.mxu0 0
    %584 = vmatprep.subr.bf16.mxu0 0
    %585 = vmatpush1.bf16.msra.mxu0 0
    %586 = vmatprep.subr.bf16.mxu0 0
    %587 = vmatpush1.bf16.msra.mxu0 0
    %588 = vmatprep.subr.bf16.mxu0 0
    %589 = vmatpush1.bf16.msra.mxu0 0
    %590 = vmatprep.subr.bf16.mxu0 0
    %591 = vmatpush1.bf16.msra.mxu0 0
    %592 = vmatprep.subr.bf16.mxu0 0
    %593 = vmatpush1.bf16.msra.mxu0 0
    %594 = vmatprep.subr.bf16.mxu0 0
    %595 = vmatpush1.bf16.msra.mxu0 0
    %596 = vmatprep.subr.bf16.mxu0 0
    %597 = vmatpush1.bf16.msra.mxu0 0
    %598 = vmatprep.subr.bf16.mxu0 0
    %599 = vmatpush1.bf16.msra.mxu0 0
    %600 = vmatprep.subr.bf16.mxu0 0
    %601 = vmatpush1.bf16.msra.mxu0 0
    %602 = vmatprep.subr.bf16.mxu0 0
    %603 = vmatpush1.bf16.msra.mxu0 0
    %604 = vmatprep.mubr.bf16.mxu0 0
    %605 = vmatmul.mubr.bf16.gmra.mrb[0].mxu0 %v564
    %v606 = vpop.f32.mrb[0].mxu0
    %v607 = vadd.f32 0.0, %v606
    %v608 = vpop.f32.mrb[0].mxu0
    %v609 = vadd.f32 0.0, %v608
    %v610 = vpop.f32.mrb[0].mxu0
    %v611 = vadd.f32 0.0, %v610
    %v612 = vpop.f32.mrb[0].mxu0
    %v613 = vadd.f32 0.0, %v612
    %614 = vdwg.mxu0
    %v617 = vunpack.c.l.b16 %v553
    %v618 = vunpack.c.l.b16 %v554
    %v619 = vpack.c.b16 %v618, %v617
    %v622 = vunpack.c.l.b16 %v549
    %v623 = vunpack.c.h.b16 %v549
    %v624 = vunpack.c.l.b16 %v550
    %v625 = vpack.c.b16 %v622, %v622
    %v626 = vpack.c.b16 %v623, %v623
    %v627 = vpack.c.b16 %v624, %v624
    %628 = vrot.lane.b32.xlu0 %v625, 2
    %v629 = vpop.permute.xlu0 %628
    %630 = vrot.lane.b32.xlu0 %v626, 2
    %v631 = vpop.permute.xlu0 %630
    %632 = vrot.lane.b32.xlu0 %v627, 2
    %v633 = vpop.permute.xlu0 %632
    %v634 = vsel %vm136, %v629, %v631
    %v635 = vsel %vm136, %v631, %v633
    %v637 = vsel %vm63, %v619, 0
    %v640 = vsel %vm67, %v634, 0
    %v643 = vsel %vm67, %v635, 0
    %645 = vmatprep.subr.bf16.mxu0 %v643
    %646 = vmatpush1.bf16.msra.mxu0 %v640
    %647 = vmatprep.subr.bf16.mxu0 0
    %648 = vmatpush1.bf16.msra.mxu0 0
    %649 = vmatprep.subr.bf16.mxu0 0
    %650 = vmatpush1.bf16.msra.mxu0 0
    %651 = vmatprep.subr.bf16.mxu0 0
    %652 = vmatpush1.bf16.msra.mxu0 0
    %653 = vmatprep.subr.bf16.mxu0 0
    %654 = vmatpush1.bf16.msra.mxu0 0
    %655 = vmatprep.subr.bf16.mxu0 0
    %656 = vmatpush1.bf16.msra.mxu0 0
    %657 = vmatprep.subr.bf16.mxu0 0
    %658 = vmatpush1.bf16.msra.mxu0 0
    %659 = vmatprep.subr.bf16.mxu0 0
    %660 = vmatpush1.bf16.msra.mxu0 0
    %661 = vmatprep.subr.bf16.mxu0 0
    %662 = vmatpush1.bf16.msra.mxu0 0
    %663 = vmatprep.subr.bf16.mxu0 0
    %664 = vmatpush1.bf16.msra.mxu0 0
    %665 = vmatprep.subr.bf16.mxu0 0
    %666 = vmatpush1.bf16.msra.mxu0 0
    %667 = vmatprep.subr.bf16.mxu0 0
    %668 = vmatpush1.bf16.msra.mxu0 0
    %669 = vmatprep.subr.bf16.mxu0 0
    %670 = vmatpush1.bf16.msra.mxu0 0
    %671 = vmatprep.subr.bf16.mxu0 0
    %672 = vmatpush1.bf16.msra.mxu0 0
    %673 = vmatprep.subr.bf16.mxu0 0
    %674 = vmatpush1.bf16.msra.mxu0 0
    %675 = vmatprep.subr.bf16.mxu0 0
    %676 = vmatpush1.bf16.msra.mxu0 0
    %677 = vmatprep.mubr.bf16.mxu0 0
    %678 = vmatmul.mubr.bf16.gmra.mrb[0].mxu0 %v637
    %v679 = vpop.f32.mrb[0].mxu0
    %v680 = vadd.f32 %v607, %v679
    %v681 = vpop.f32.mrb[0].mxu0
    %v682 = vadd.f32 %v609, %v681
    %v683 = vpop.f32.mrb[0].mxu0
    %v684 = vadd.f32 %v611, %v683
    %v685 = vpop.f32.mrb[0].mxu0
    %v686 = vadd.f32 %v613, %v685
    %687 = vdwg.mxu0
    %s688 = scalar_lea.vmem %s7, 16
    %v689 = vld [vmem:[%s688] sm:$0xf]
    %v690 = vld [vmem:[%s688 + $0x4] sm:$0xf]
    %v693 = vunpack.c.l.b16 %v689
    %v694 = vunpack.c.l.b16 %v690
    %v695 = vpack.c.b16 %v694, %v693
    %v698 = vunpack.c.l.b16 %v551
    %v699 = vunpack.c.h.b16 %v551
    %v700 = vunpack.c.l.b16 %v552
    %v701 = vpack.c.b16 %v698, %v698
    %v702 = vpack.c.b16 %v699, %v699
    %v703 = vpack.c.b16 %v700, %v700
    %704 = vrot.lane.b32.xlu0 %v701, 126
    %v705 = vpop.permute.xlu0 %704
    %706 = vrot.lane.b32.xlu0 %v702, 126
    %v707 = vpop.permute.xlu0 %706
    %708 = vrot.lane.b32.xlu0 %v703, 126
    %v709 = vpop.permute.xlu0 %708
    %v710 = vsel %vm213, %v705, %v707
    %v711 = vsel %vm213, %v707, %v709
    %v713 = vsel %vm63, %v695, 0
    %v716 = vsel %vm67, %v710, 0
    %v719 = vsel %vm67, %v711, 0
    %721 = vmatprep.subr.bf16.mxu0 %v719
    %722 = vmatpush1.bf16.msra.mxu0 %v716
    %723 = vmatprep.subr.bf16.mxu0 0
    %724 = vmatpush1.bf16.msra.mxu0 0
    %725 = vmatprep.subr.bf16.mxu0 0
    %726 = vmatpush1.bf16.msra.mxu0 0
    %727 = vmatprep.subr.bf16.mxu0 0
    %728 = vmatpush1.bf16.msra.mxu0 0
    %729 = vmatprep.subr.bf16.mxu0 0
    %730 = vmatpush1.bf16.msra.mxu0 0
    %731 = vmatprep.subr.bf16.mxu0 0
    %732 = vmatpush1.bf16.msra.mxu0 0
    %733 = vmatprep.subr.bf16.mxu0 0
    %734 = vmatpush1.bf16.msra.mxu0 0
    %735 = vmatprep.subr.bf16.mxu0 0
    %736 = vmatpush1.bf16.msra.mxu0 0
    %737 = vmatprep.subr.bf16.mxu0 0
    %738 = vmatpush1.bf16.msra.mxu0 0
    %739 = vmatprep.subr.bf16.mxu0 0
    %740 = vmatpush1.bf16.msra.mxu0 0
    %741 = vmatprep.subr.bf16.mxu0 0
    %742 = vmatpush1.bf16.msra.mxu0 0
    %743 = vmatprep.subr.bf16.mxu0 0
    %744 = vmatpush1.bf16.msra.mxu0 0
    %745 = vmatprep.subr.bf16.mxu0 0
    %746 = vmatpush1.bf16.msra.mxu0 0
    %747 = vmatprep.subr.bf16.mxu0 0
    %748 = vmatpush1.bf16.msra.mxu0 0
    %749 = vmatprep.subr.bf16.mxu0 0
    %750 = vmatpush1.bf16.msra.mxu0 0
    %751 = vmatprep.subr.bf16.mxu0 0
    %752 = vmatpush1.bf16.msra.mxu0 0
    %753 = vmatprep.mubr.bf16.mxu0 0
    %754 = vmatmul.mubr.bf16.gmra.mrb[0].mxu0 %v713
    %v755 = vpop.f32.mrb[0].mxu0
    %v756 = vadd.f32 0.0, %v755
    %v757 = vpop.f32.mrb[0].mxu0
    %v758 = vadd.f32 0.0, %v757
    %v759 = vpop.f32.mrb[0].mxu0
    %v760 = vadd.f32 0.0, %v759
    %v761 = vpop.f32.mrb[0].mxu0
    %v762 = vadd.f32 0.0, %v761
    %763 = vdwg.mxu0
    %v764 = vadd.f32 %v680, %v756
    %v765 = vadd.f32 %v682, %v758
    %v766 = vadd.f32 %v684, %v760
    %v767 = vadd.f32 %v686, %v762
    %v768 = vld [vmem:[%s8] sm:$0xff]
    %v769 = vld [vmem:[%s8 + $0x8] sm:$0xff]
    %771 = vset.pattern.permute.xlu0 0
    %772 = vperm.xlu0 %771, %v768
    %v773 = vpop.permute.xlu0 %772
    %776 = vset.pattern.permute.xlu0 0
    %777 = vperm.xlu0 %776, %v769
    %v778 = vpop.permute.xlu0 %777
    %v780 = vadd.f32 %v764, %v773
    %v781 = vadd.f32 %v765, %v773
    %v782 = vadd.f32 %v766, %v778
    %v783 = vadd.f32 %v767, %v778
    %vm784 = vcmp.gt.f32.partialorder %v780, 0.0
    %vm785 = vcmp.gt.f32.partialorder %v781, 0.0
    %vm786 = vcmp.gt.f32.partialorder %v782, 0.0
    %vm787 = vcmp.gt.f32.partialorder %v783, 0.0
    %v788 = vmul.f32 %v780, 0.2
    %v789 = vmul.f32 %v781, 0.2
    %v790 = vmul.f32 %v782, 0.2
    %v791 = vmul.f32 %v783, 0.2
    %v792 = vsel %vm784, %v780, %v788
    %v793 = vsel %vm785, %v781, %v789
    %v794 = vsel %vm786, %v782, %v790
    %v795 = vsel %vm787, %v783, %v791
    %v796 = vld [vmem:[#allocation4] sm:$0xff]
    %v797 = vld [vmem:[#allocation4 + $0x8] sm:$0xff]
    %v798 = vld [vmem:[#allocation4 + $0x10] sm:$0xff]
    %v799 = vld [vmem:[#allocation4 + $0x18] sm:$0xff]
    %v800 = vadd.f32 %v796, %v792
    %v801 = vadd.f32 %v797, %v793
    %v802 = vadd.f32 %v798, %v794
    %v803 = vadd.f32 %v799, %v795
    %804 = vst [vmem:[#allocation4] sm:$0xff] %v800
    %805 = vst [vmem:[#allocation4 + $0x8] sm:$0xff] %v801
    %806 = vst [vmem:[#allocation4 + $0x10] sm:$0xff] %v802
    %807 = vst [vmem:[#allocation4 + $0x18] sm:$0xff] %v803
    %s808 = scalar_lea.vmem %s0, 8
    %v809 = vld [vmem:[%s808] sm:$0xff]
    %v810 = vunpack.c.l.bf16 %v809
    %v811 = vunpack.c.h.bf16 %v809
    %812 = vst [vmem:[#allocation2 + $0x4] sm:$0xff] %v809
    %v813 = vld [vmem:[#allocation2] sm:$0xff]
    %v814 = vld [vmem:[#allocation2 + $0x8] sm:$0xf]
    %v815 = vld [vmem:[#allocation2 + $0x4] sm:$0xff]
    %v816 = vld [vmem:[#allocation2 + $0xc] sm:$0xf]
    %v817 = vld [vmem:[%s3] sm:$0xf]
    %v818 = vld [vmem:[%s3 + $0x4] sm:$0xf]
    %v819 = vld [vmem:[%s50] sm:$0xf]
    %v820 = vld [vmem:[%s50 + $0x4] sm:$0xf]
    %v823 = vunpack.c.l.b16 %v819
    %v824 = vunpack.c.l.b16 %v820
    %v825 = vpack.c.b16 %v824, %v823
    %v827 = vunpack.c.l.b16 %v809
    %v828 = vunpack.c.h.b16 %v809
    %v829 = vpack.c.b16 %v827, %v827
    %v830 = vpack.c.b16 %v828, %v828
    %v832 = vsel %vm63, %v825, 0
    %v835 = vsel %vm67, %v829, 0
    %v838 = vsel %vm67, %v830, 0
    %840 = vmatprep.subr.bf16.mxu0 %v838
    %841 = vmatpush1.bf16.msra.mxu0 %v835
    %842 = vmatprep.subr.bf16.mxu0 0
    %843 = vmatpush1.bf16.msra.mxu0 0
    %844 = vmatprep.subr.bf16.mxu0 0
    %845 = vmatpush1.bf16.msra.mxu0 0
    %846 = vmatprep.subr.bf16.mxu0 0
    %847 = vmatpush1.bf16.msra.mxu0 0
    %848 = vmatprep.subr.bf16.mxu0 0
    %849 = vmatpush1.bf16.msra.mxu0 0
    %850 = vmatprep.subr.bf16.mxu0 0
    %851 = vmatpush1.bf16.msra.mxu0 0
    %852 = vmatprep.subr.bf16.mxu0 0
    %853 = vmatpush1.bf16.msra.mxu0 0
    %854 = vmatprep.subr.bf16.mxu0 0
    %855 = vmatpush1.bf16.msra.mxu0 0
    %856 = vmatprep.subr.bf16.mxu0 0
    %857 = vmatpush1.bf16.msra.mxu0 0
    %858 = vmatprep.subr.bf16.mxu0 0
    %859 = vmatpush1.bf16.msra.mxu0 0
    %860 = vmatprep.subr.bf16.mxu0 0
    %861 = vmatpush1.bf16.msra.mxu0 0
    %862 = vmatprep.subr.bf16.mxu0 0
    %863 = vmatpush1.bf16.msra.mxu0 0
    %864 = vmatprep.subr.bf16.mxu0 0
    %865 = vmatpush1.bf16.msra.mxu0 0
    %866 = vmatprep.subr.bf16.mxu0 0
    %867 = vmatpush1.bf16.msra.mxu0 0
    %868 = vmatprep.subr.bf16.mxu0 0
    %869 = vmatpush1.bf16.msra.mxu0 0
    %870 = vmatprep.subr.bf16.mxu0 0
    %871 = vmatpush1.bf16.msra.mxu0 0
    %872 = vmatprep.mubr.bf16.mxu0 0
    %873 = vmatmul.mubr.bf16.gmra.mrb[0].mxu0 %v832
    %v874 = vpop.f32.mrb[0].mxu0
    %v875 = vadd.f32 0.0, %v874
    %v876 = vpop.f32.mrb[0].mxu0
    %v877 = vadd.f32 0.0, %v876
    %v878 = vpop.f32.mrb[0].mxu0
    %v879 = vadd.f32 0.0, %v878
    %v880 = vpop.f32.mrb[0].mxu0
    %v881 = vadd.f32 0.0, %v880
    %882 = vdwg.mxu0
    %v885 = vunpack.c.l.b16 %v817
    %v886 = vunpack.c.l.b16 %v818
    %v887 = vpack.c.b16 %v886, %v885
    %v890 = vunpack.c.l.b16 %v813
    %v891 = vunpack.c.h.b16 %v813
    %v892 = vunpack.c.l.b16 %v814
    %v893 = vpack.c.b16 %v890, %v890
    %v894 = vpack.c.b16 %v891, %v891
    %v895 = vpack.c.b16 %v892, %v892
    %896 = vrot.lane.b32.xlu0 %v893, 2
    %v897 = vpop.permute.xlu0 %896
    %898 = vrot.lane.b32.xlu0 %v894, 2
    %v899 = vpop.permute.xlu0 %898
    %900 = vrot.lane.b32.xlu0 %v895, 2
    %v901 = vpop.permute.xlu0 %900
    %v902 = vsel %vm136, %v897, %v899
    %v903 = vsel %vm136, %v899, %v901
    %v905 = vsel %vm63, %v887, 0
    %v908 = vsel %vm67, %v902, 0
    %v911 = vsel %vm67, %v903, 0
    %913 = vmatprep.subr.bf16.mxu0 %v911
    %914 = vmatpush1.bf16.msra.mxu0 %v908
    %915 = vmatprep.subr.bf16.mxu0 0
    %916 = vmatpush1.bf16.msra.mxu0 0
    %917 = vmatprep.subr.bf16.mxu0 0
    %918 = vmatpush1.bf16.msra.mxu0 0
    %919 = vmatprep.subr.bf16.mxu0 0
    %920 = vmatpush1.bf16.msra.mxu0 0
    %921 = vmatprep.subr.bf16.mxu0 0
    %922 = vmatpush1.bf16.msra.mxu0 0
    %923 = vmatprep.subr.bf16.mxu0 0
    %924 = vmatpush1.bf16.msra.mxu0 0
    %925 = vmatprep.subr.bf16.mxu0 0
    %926 = vmatpush1.bf16.msra.mxu0 0
    %927 = vmatprep.subr.bf16.mxu0 0
    %928 = vmatpush1.bf16.msra.mxu0 0
    %929 = vmatprep.subr.bf16.mxu0 0
    %930 = vmatpush1.bf16.msra.mxu0 0
    %931 = vmatprep.subr.bf16.mxu0 0
    %932 = vmatpush1.bf16.msra.mxu0 0
    %933 = vmatprep.subr.bf16.mxu0 0
    %934 = vmatpush1.bf16.msra.mxu0 0
    %935 = vmatprep.subr.bf16.mxu0 0
    %936 = vmatpush1.bf16.msra.mxu0 0
    %937 = vmatprep.subr.bf16.mxu0 0
    %938 = vmatpush1.bf16.msra.mxu0 0
    %939 = vmatprep.subr.bf16.mxu0 0
    %940 = vmatpush1.bf16.msra.mxu0 0
    %941 = vmatprep.subr.bf16.mxu0 0
    %942 = vmatpush1.bf16.msra.mxu0 0
    %943 = vmatprep.subr.bf16.mxu0 0
    %944 = vmatpush1.bf16.msra.mxu0 0
    %945 = vmatprep.mubr.bf16.mxu0 0
    %946 = vmatmul.mubr.bf16.gmra.mrb[0].mxu0 %v905
    %v947 = vpop.f32.mrb[0].mxu0
    %v948 = vadd.f32 %v875, %v947
    %v949 = vpop.f32.mrb[0].mxu0
    %v950 = vadd.f32 %v877, %v949
    %v951 = vpop.f32.mrb[0].mxu0
    %v952 = vadd.f32 %v879, %v951
    %v953 = vpop.f32.mrb[0].mxu0
    %v954 = vadd.f32 %v881, %v953
    %955 = vdwg.mxu0
    %v956 = vld [vmem:[%s191] sm:$0xf]
    %v957 = vld [vmem:[%s191 + $0x4] sm:$0xf]
    %v960 = vunpack.c.l.b16 %v956
    %v961 = vunpack.c.l.b16 %v957
    %v962 = vpack.c.b16 %v961, %v960
    %v965 = vunpack.c.l.b16 %v815
    %v966 = vunpack.c.h.b16 %v815
    %v967 = vunpack.c.l.b16 %v816
    %v968 = vpack.c.b16 %v965, %v965
    %v969 = vpack.c.b16 %v966, %v966
    %v970 = vpack.c.b16 %v967, %v967
    %971 = vrot.lane.b32.xlu0 %v968, 126
    %v972 = vpop.permute.xlu0 %971
    %973 = vrot.lane.b32.xlu0 %v969, 126
    %v974 = vpop.permute.xlu0 %973
    %975 = vrot.lane.b32.xlu0 %v970, 126
    %v976 = vpop.permute.xlu0 %975
    %v977 = vsel %vm213, %v972, %v974
    %v978 = vsel %vm213, %v974, %v976
    %v980 = vsel %vm63, %v962, 0
    %v983 = vsel %vm67, %v977, 0
    %v986 = vsel %vm67, %v978, 0
    %988 = vmatprep.subr.bf16.mxu0 %v986
    %989 = vmatpush1.bf16.msra.mxu0 %v983
    %990 = vmatprep.subr.bf16.mxu0 0
    %991 = vmatpush1.bf16.msra.mxu0 0
    %992 = vmatprep.subr.bf16.mxu0 0
    %993 = vmatpush1.bf16.msra.mxu0 0
    %994 = vmatprep.subr.bf16.mxu0 0
    %995 = vmatpush1.bf16.msra.mxu0 0
    %996 = vmatprep.subr.bf16.mxu0 0
    %997 = vmatpush1.bf16.msra.mxu0 0
    %998 = vmatprep.subr.bf16.mxu0 0
    %999 = vmatpush1.bf16.msra.mxu0 0
    %1000 = vmatprep.subr.bf16.mxu0 0
    %1001 = vmatpush1.bf16.msra.mxu0 0
    %1002 = vmatprep.subr.bf16.mxu0 0
    %1003 = vmatpush1.bf16.msra.mxu0 0
    %1004 = vmatprep.subr.bf16.mxu0 0
    %1005 = vmatpush1.bf16.msra.mxu0 0
    %1006 = vmatprep.subr.bf16.mxu0 0
    %1007 = vmatpush1.bf16.msra.mxu0 0
    %1008 = vmatprep.subr.bf16.mxu0 0
    %1009 = vmatpush1.bf16.msra.mxu0 0
    %1010 = vmatprep.subr.bf16.mxu0 0
    %1011 = vmatpush1.bf16.msra.mxu0 0
    %1012 = vmatprep.subr.bf16.mxu0 0
    %1013 = vmatpush1.bf16.msra.mxu0 0
    %1014 = vmatprep.subr.bf16.mxu0 0
    %1015 = vmatpush1.bf16.msra.mxu0 0
    %1016 = vmatprep.subr.bf16.mxu0 0
    %1017 = vmatpush1.bf16.msra.mxu0 0
    %1018 = vmatprep.subr.bf16.mxu0 0
    %1019 = vmatpush1.bf16.msra.mxu0 0
    %1020 = vmatprep.mubr.bf16.mxu0 0
    %1021 = vmatmul.mubr.bf16.gmra.mrb[0].mxu0 %v980
    %v1022 = vpop.f32.mrb[0].mxu0
    %v1023 = vadd.f32 0.0, %v1022
    %v1024 = vpop.f32.mrb[0].mxu0
    %v1025 = vadd.f32 0.0, %v1024
    %v1026 = vpop.f32.mrb[0].mxu0
    %v1027 = vadd.f32 0.0, %v1026
    %v1028 = vpop.f32.mrb[0].mxu0
    %v1029 = vadd.f32 0.0, %v1028
    %1030 = vdwg.mxu0
    %v1031 = vadd.f32 %v948, %v1023
    %v1032 = vadd.f32 %v950, %v1025
    %v1033 = vadd.f32 %v952, %v1027
    %v1034 = vadd.f32 %v954, %v1029
    %v1035 = vld [vmem:[%s4] sm:$0xff]
    %v1036 = vld [vmem:[%s4 + $0x8] sm:$0xff]
    %1038 = vset.pattern.permute.xlu0 0
    %1039 = vperm.xlu0 %1038, %v1035
    %v1040 = vpop.permute.xlu0 %1039
    %1043 = vset.pattern.permute.xlu0 0
    %1044 = vperm.xlu0 %1043, %v1036
    %v1045 = vpop.permute.xlu0 %1044
    %v1047 = vadd.f32 %v1031, %v1040
    %v1048 = vadd.f32 %v1032, %v1040
    %v1049 = vadd.f32 %v1033, %v1045
    %v1050 = vadd.f32 %v1034, %v1045
    %vm1051 = vcmp.gt.f32.partialorder %v1047, 0.0
    %vm1052 = vcmp.gt.f32.partialorder %v1048, 0.0
    %vm1053 = vcmp.gt.f32.partialorder %v1049, 0.0
    %vm1054 = vcmp.gt.f32.partialorder %v1050, 0.0
    %v1055 = vmul.f32 %v1047, 0.2
    %v1056 = vmul.f32 %v1048, 0.2
    %v1057 = vmul.f32 %v1049, 0.2
    %v1058 = vmul.f32 %v1050, 0.2
    %v1059 = vsel %vm1051, %v1047, %v1055
    %v1060 = vsel %vm1052, %v1048, %v1056
    %v1061 = vsel %vm1053, %v1049, %v1057
    %v1062 = vsel %vm1054, %v1050, %v1058
    %s1063 = scalar_lea.vmem [#allocation4], 32
    %1064 = vst [vmem:[%s1063] sm:$0xff] %v1059
    %1065 = vst [vmem:[%s1063 + $0x8] sm:$0xff] %v1060
    %1066 = vst [vmem:[%s1063 + $0x10] sm:$0xff] %v1061
    %1067 = vst [vmem:[%s1063 + $0x18] sm:$0xff] %v1062
    %s1068 = scalar_lea.vmem %s1, 16
    %v1069 = vld [vmem:[%s1068] sm:$0xff]
    %v1070 = vld [vmem:[%s1068 + $0x8] sm:$0xff]
    %v1071 = vunpack.c.l.bf16 %v1069
    %v1072 = vunpack.c.h.bf16 %v1069
    %v1073 = vunpack.c.l.bf16 %v1070
    %v1074 = vunpack.c.h.bf16 %v1070
    %v1075 = vmul.f32 %v1071, %v810
    %v1076 = vmul.f32 %v1072, %v811
    %v1077 = vadd.f32 %v1075, %v1073
    %v1078 = vadd.f32 %v1076, %v1074
    %v1079 = vpack.c.bf16 %v1077, %v1077
    %v1080 = vpack.c.bf16 %v1078, %v1078
    %v1083 = vunpack.c.l.b16 %v1079
    %v1084 = vunpack.c.l.b16 %v1080
    %v1085 = vpack.c.b16 %v1084, %v1083
    %1087 = vst [vmem:[#allocation3 + $0x4] sm:$0xff] %v1085
    %v1088 = vld [vmem:[#allocation3] sm:$0xff]
    %v1089 = vld [vmem:[#allocation3 + $0x8] sm:$0xf]
    %v1090 = vld [vmem:[#allocation3 + $0x4] sm:$0xff]
    %v1091 = vld [vmem:[#allocation3 + $0xc] sm:$0xf]
    %v1092 = vld [vmem:[%s5] sm:$0xf]
    %v1093 = vld [vmem:[%s328] sm:$0xf]
    %v1095 = vsel %vm63, %v1093, 0
    %v1098 = vsel %vm67, %v1079, 0
    %v1101 = vsel %vm67, %v1080, 0
    %1103 = vmatprep.subr.bf16.mxu0 %v1101
    %1104 = vmatpush1.bf16.msra.mxu0 %v1098
    %1105 = vmatprep.subr.bf16.mxu0 0
    %1106 = vmatpush1.bf16.msra.mxu0 0
    %1107 = vmatprep.subr.bf16.mxu0 0
    %1108 = vmatpush1.bf16.msra.mxu0 0
    %1109 = vmatprep.subr.bf16.mxu0 0
    %1110 = vmatpush1.bf16.msra.mxu0 0
    %1111 = vmatprep.subr.bf16.mxu0 0
    %1112 = vmatpush1.bf16.msra.mxu0 0
    %1113 = vmatprep.subr.bf16.mxu0 0
    %1114 = vmatpush1.bf16.msra.mxu0 0
    %1115 = vmatprep.subr.bf16.mxu0 0
    %1116 = vmatpush1.bf16.msra.mxu0 0
    %1117 = vmatprep.subr.bf16.mxu0 0
    %1118 = vmatpush1.bf16.msra.mxu0 0
    %1119 = vmatprep.subr.bf16.mxu0 0
    %1120 = vmatpush1.bf16.msra.mxu0 0
    %1121 = vmatprep.subr.bf16.mxu0 0
    %1122 = vmatpush1.bf16.msra.mxu0 0
    %1123 = vmatprep.subr.bf16.mxu0 0
    %1124 = vmatpush1.bf16.msra.mxu0 0
    %1125 = vmatprep.subr.bf16.mxu0 0
    %1126 = vmatpush1.bf16.msra.mxu0 0
    %1127 = vmatprep.subr.bf16.mxu0 0
    %1128 = vmatpush1.bf16.msra.mxu0 0
    %1129 = vmatprep.subr.bf16.mxu0 0
    %1130 = vmatpush1.bf16.msra.mxu0 0
    %1131 = vmatprep.subr.bf16.mxu0 0
    %1132 = vmatpush1.bf16.msra.mxu0 0
    %1133 = vmatprep.subr.bf16.mxu0 0
    %1134 = vmatpush1.bf16.msra.mxu0 0
    %1135 = vmatprep.mubr.bf16.mxu0 0
    %1136 = vmatmul.mubr.bf16.gmra.mrb[0].mxu0 %v1095
    %v1137 = vpop.f32.mrb[0].mxu0
    %v1138 = vadd.f32 0.0, %v1137
    %v1139 = vpop.f32.mrb[0].mxu0
    %v1140 = vadd.f32 0.0, %v1139
    %v1141 = vpop.f32.mrb[0].mxu0
    %v1142 = vpop.f32.mrb[0].mxu0
    %1143 = vdwg.mxu0
    %v1146 = vunpack.c.l.b16 %v1088
    %v1147 = vunpack.c.h.b16 %v1088
    %v1148 = vunpack.c.l.b16 %v1089
    %v1149 = vpack.c.b16 %v1146, %v1146
    %v1150 = vpack.c.b16 %v1147, %v1147
    %v1151 = vpack.c.b16 %v1148, %v1148
    %1152 = vrot.lane.b32.xlu0 %v1149, 2
    %v1153 = vpop.permute.xlu0 %1152
    %1154 = vrot.lane.b32.xlu0 %v1150, 2
    %v1155 = vpop.permute.xlu0 %1154
    %1156 = vrot.lane.b32.xlu0 %v1151, 2
    %v1157 = vpop.permute.xlu0 %1156
    %v1158 = vsel %vm136, %v1153, %v1155
    %v1159 = vsel %vm136, %v1155, %v1157
    %v1161 = vsel %vm63, %v1092, 0
    %v1164 = vsel %vm67, %v1158, 0
    %v1167 = vsel %vm67, %v1159, 0
    %1169 = vmatprep.subr.bf16.mxu0 %v1167
    %1170 = vmatpush1.bf16.msra.mxu0 %v1164
    %1171 = vmatprep.subr.bf16.mxu0 0
    %1172 = vmatpush1.bf16.msra.mxu0 0
    %1173 = vmatprep.subr.bf16.mxu0 0
    %1174 = vmatpush1.bf16.msra.mxu0 0
    %1175 = vmatprep.subr.bf16.mxu0 0
    %1176 = vmatpush1.bf16.msra.mxu0 0
    %1177 = vmatprep.subr.bf16.mxu0 0
    %1178 = vmatpush1.bf16.msra.mxu0 0
    %1179 = vmatprep.subr.bf16.mxu0 0
    %1180 = vmatpush1.bf16.msra.mxu0 0
    %1181 = vmatprep.subr.bf16.mxu0 0
    %1182 = vmatpush1.bf16.msra.mxu0 0
    %1183 = vmatprep.subr.bf16.mxu0 0
    %1184 = vmatpush1.bf16.msra.mxu0 0
    %1185 = vmatprep.subr.bf16.mxu0 0
    %1186 = vmatpush1.bf16.msra.mxu0 0
    %1187 = vmatprep.subr.bf16.mxu0 0
    %1188 = vmatpush1.bf16.msra.mxu0 0
    %1189 = vmatprep.subr.bf16.mxu0 0
    %1190 = vmatpush1.bf16.msra.mxu0 0
    %1191 = vmatprep.subr.bf16.mxu0 0
    %1192 = vmatpush1.bf16.msra.mxu0 0
    %1193 = vmatprep.subr.bf16.mxu0 0
    %1194 = vmatpush1.bf16.msra.mxu0 0
    %1195 = vmatprep.subr.bf16.mxu0 0
    %1196 = vmatpush1.bf16.msra.mxu0 0
    %1197 = vmatprep.subr.bf16.mxu0 0
    %1198 = vmatpush1.bf16.msra.mxu0 0
    %1199 = vmatprep.subr.bf16.mxu0 0
    %1200 = vmatpush1.bf16.msra.mxu0 0
    %1201 = vmatprep.mubr.bf16.mxu0 0
    %1202 = vmatmul.mubr.bf16.gmra.mrb[0].mxu0 %v1161
    %v1203 = vpop.f32.mrb[0].mxu0
    %v1204 = vadd.f32 %v1138, %v1203
    %v1205 = vpop.f32.mrb[0].mxu0
    %v1206 = vadd.f32 %v1140, %v1205
    %v1207 = vpop.f32.mrb[0].mxu0
    %v1208 = vpop.f32.mrb[0].mxu0
    %1209 = vdwg.mxu0
    %v1210 = vld [vmem:[%s446] sm:$0xf]
    %v1213 = vunpack.c.l.b16 %v1090
    %v1214 = vunpack.c.h.b16 %v1090
    %v1215 = vunpack.c.l.b16 %v1091
    %v1216 = vpack.c.b16 %v1213, %v1213
    %v1217 = vpack.c.b16 %v1214, %v1214
    %v1218 = vpack.c.b16 %v1215, %v1215
    %1219 = vrot.lane.b32.xlu0 %v1216, 126
    %v1220 = vpop.permute.xlu0 %1219
    %1221 = vrot.lane.b32.xlu0 %v1217, 126
    %v1222 = vpop.permute.xlu0 %1221
    %1223 = vrot.lane.b32.xlu0 %v1218, 126
    %v1224 = vpop.permute.xlu0 %1223
    %v1225 = vsel %vm213, %v1220, %v1222
    %v1226 = vsel %vm213, %v1222, %v1224
    %v1228 = vsel %vm63, %v1210, 0
    %v1231 = vsel %vm67, %v1225, 0
    %v1234 = vsel %vm67, %v1226, 0
    %1236 = vmatprep.subr.bf16.mxu0 %v1234
    %1237 = vmatpush1.bf16.msra.mxu0 %v1231
    %1238 = vmatprep.subr.bf16.mxu0 0
    %1239 = vmatpush1.bf16.msra.mxu0 0
    %1240 = vmatprep.subr.bf16.mxu0 0
    %1241 = vmatpush1.bf16.msra.mxu0 0
    %1242 = vmatprep.subr.bf16.mxu0 0
    %1243 = vmatpush1.bf16.msra.mxu0 0
    %1244 = vmatprep.subr.bf16.mxu0 0
    %1245 = vmatpush1.bf16.msra.mxu0 0
    %1246 = vmatprep.subr.bf16.mxu0 0
    %1247 = vmatpush1.bf16.msra.mxu0 0
    %1248 = vmatprep.subr.bf16.mxu0 0
    %1249 = vmatpush1.bf16.msra.mxu0 0
    %1250 = vmatprep.subr.bf16.mxu0 0
    %1251 = vmatpush1.bf16.msra.mxu0 0
    %1252 = vmatprep.subr.bf16.mxu0 0
    %1253 = vmatpush1.bf16.msra.mxu0 0
    %1254 = vmatprep.subr.bf16.mxu0 0
    %1255 = vmatpush1.bf16.msra.mxu0 0
    %1256 = vmatprep.subr.bf16.mxu0 0
    %1257 = vmatpush1.bf16.msra.mxu0 0
    %1258 = vmatprep.subr.bf16.mxu0 0
    %1259 = vmatpush1.bf16.msra.mxu0 0
    %1260 = vmatprep.subr.bf16.mxu0 0
    %1261 = vmatpush1.bf16.msra.mxu0 0
    %1262 = vmatprep.subr.bf16.mxu0 0
    %1263 = vmatpush1.bf16.msra.mxu0 0
    %1264 = vmatprep.subr.bf16.mxu0 0
    %1265 = vmatpush1.bf16.msra.mxu0 0
    %1266 = vmatprep.subr.bf16.mxu0 0
    %1267 = vmatpush1.bf16.msra.mxu0 0
    %1268 = vmatprep.mubr.bf16.mxu0 0
    %1269 = vmatmul.mubr.bf16.gmra.mrb[0].mxu0 %v1228
    %v1270 = vpop.f32.mrb[0].mxu0
    %v1271 = vadd.f32 0.0, %v1270
    %v1272 = vpop.f32.mrb[0].mxu0
    %v1273 = vadd.f32 0.0, %v1272
    %v1274 = vpop.f32.mrb[0].mxu0
    %v1275 = vpop.f32.mrb[0].mxu0
    %1276 = vdwg.mxu0
    %v1277 = vadd.f32 %v1204, %v1271
    %v1278 = vadd.f32 %v1206, %v1273
    %v1279 = vld [vmem:[%s6] sm:$0xff]
    %1281 = vset.pattern.permute.xlu0 0
    %1282 = vperm.xlu0 %1281, %v1279
    %v1283 = vpop.permute.xlu0 %1282
    %v1285 = vadd.f32 %v1277, %v1283
    %v1286 = vadd.f32 %v1278, %v1283
    %vm1287 = vcmp.gt.f32.partialorder %v1285, 0.0
    %vm1288 = vcmp.gt.f32.partialorder %v1286, 0.0
    %v1289 = vmul.f32 %v1285, 0.2
    %v1290 = vmul.f32 %v1286, 0.2
    %v1291 = vsel %vm1287, %v1285, %v1289
    %v1292 = vsel %vm1288, %v1286, %v1290
    %s1293 = scalar_lea.vmem %s2, 16
    %v1294 = vld [vmem:[%s1293] sm:$0xff]
    %v1295 = vld [vmem:[%s1293 + $0x8] sm:$0xff]
    %v1296 = vunpack.c.l.bf16 %v1294
    %v1297 = vunpack.c.h.bf16 %v1294
    %v1298 = vunpack.c.l.bf16 %v1295
    %v1299 = vunpack.c.h.bf16 %v1295
    %v1300 = vmul.f32 %v1296, %v1291
    %v1301 = vmul.f32 %v1297, %v1292
    %v1302 = vadd.f32 %v1300, %v1298
    %v1303 = vadd.f32 %v1301, %v1299
    %v1304 = vpack.c.bf16 %v1302, %v1302
    %v1305 = vpack.c.bf16 %v1303, %v1303
    %v1308 = vunpack.c.l.b16 %v1304
    %v1309 = vunpack.c.l.b16 %v1305
    %v1310 = vpack.c.b16 %v1309, %v1308
    %1312 = vst [vmem:[#allocation2 + $0x4] sm:$0xff] %v1310
    %v1313 = vld [vmem:[#allocation2] sm:$0xff]
    %v1314 = vld [vmem:[#allocation2 + $0x8] sm:$0xf]
    %v1315 = vld [vmem:[#allocation2 + $0x4] sm:$0xff]
    %v1316 = vld [vmem:[#allocation2 + $0xc] sm:$0xf]
    %v1317 = vld [vmem:[%s7] sm:$0xf]
    %v1318 = vld [vmem:[%s7 + $0x4] sm:$0xf]
    %v1319 = vld [vmem:[%s555] sm:$0xf]
    %v1320 = vld [vmem:[%s555 + $0x4] sm:$0xf]
    %v1323 = vunpack.c.l.b16 %v1319
    %v1324 = vunpack.c.l.b16 %v1320
    %v1325 = vpack.c.b16 %v1324, %v1323
    %v1327 = vsel %vm63, %v1325, 0
    %v1330 = vsel %vm67, %v1304, 0
    %v1333 = vsel %vm67, %v1305, 0
    %1335 = vmatprep.subr.bf16.mxu0 %v1333
    %1336 = vmatpush1.bf16.msra.mxu0 %v1330
    %1337 = vmatprep.subr.bf16.mxu0 0
    %1338 = vmatpush1.bf16.msra.mxu0 0
    %1339 = vmatprep.subr.bf16.mxu0 0
    %1340 = vmatpush1.bf16.msra.mxu0 0
    %1341 = vmatprep.subr.bf16.mxu0 0
    %1342 = vmatpush1.bf16.msra.mxu0 0
    %1343 = vmatprep.subr.bf16.mxu0 0
    %1344 = vmatpush1.bf16.msra.mxu0 0
    %1345 = vmatprep.subr.bf16.mxu0 0
    %1346 = vmatpush1.bf16.msra.mxu0 0
    %1347 = vmatprep.subr.bf16.mxu0 0
    %1348 = vmatpush1.bf16.msra.mxu0 0
    %1349 = vmatprep.subr.bf16.mxu0 0
    %1350 = vmatpush1.bf16.msra.mxu0 0
    %1351 = vmatprep.subr.bf16.mxu0 0
    %1352 = vmatpush1.bf16.msra.mxu0 0
    %1353 = vmatprep.subr.bf16.mxu0 0
    %1354 = vmatpush1.bf16.msra.mxu0 0
    %1355 = vmatprep.subr.bf16.mxu0 0
    %1356 = vmatpush1.bf16.msra.mxu0 0
    %1357 = vmatprep.subr.bf16.mxu0 0
    %1358 = vmatpush1.bf16.msra.mxu0 0
    %1359 = vmatprep.subr.bf16.mxu0 0
    %1360 = vmatpush1.bf16.msra.mxu0 0
    %1361 = vmatprep.subr.bf16.mxu0 0
    %1362 = vmatpush1.bf16.msra.mxu0 0
    %1363 = vmatprep.subr.bf16.mxu0 0
    %1364 = vmatpush1.bf16.msra.mxu0 0
    %1365 = vmatprep.subr.bf16.mxu0 0
    %1366 = vmatpush1.bf16.msra.mxu0 0
    %1367 = vmatprep.mubr.bf16.mxu0 0
    %1368 = vmatmul.mubr.bf16.gmra.mrb[0].mxu0 %v1327
    %v1369 = vpop.f32.mrb[0].mxu0
    %v1370 = vadd.f32 0.0, %v1369
    %v1371 = vpop.f32.mrb[0].mxu0
    %v1372 = vadd.f32 0.0, %v1371
    %v1373 = vpop.f32.mrb[0].mxu0
    %v1374 = vadd.f32 0.0, %v1373
    %v1375 = vpop.f32.mrb[0].mxu0
    %v1376 = vadd.f32 0.0, %v1375
    %1377 = vdwg.mxu0
    %v1380 = vunpack.c.l.b16 %v1317
    %v1381 = vunpack.c.l.b16 %v1318
    %v1382 = vpack.c.b16 %v1381, %v1380
    %v1385 = vunpack.c.l.b16 %v1313
    %v1386 = vunpack.c.h.b16 %v1313
    %v1387 = vunpack.c.l.b16 %v1314
    %v1388 = vpack.c.b16 %v1385, %v1385
    %v1389 = vpack.c.b16 %v1386, %v1386
    %v1390 = vpack.c.b16 %v1387, %v1387
    %1391 = vrot.lane.b32.xlu0 %v1388, 2
    %v1392 = vpop.permute.xlu0 %1391
    %1393 = vrot.lane.b32.xlu0 %v1389, 2
    %v1394 = vpop.permute.xlu0 %1393
    %1395 = vrot.lane.b32.xlu0 %v1390, 2
    %v1396 = vpop.permute.xlu0 %1395
    %v1397 = vsel %vm136, %v1392, %v1394
    %v1398 = vsel %vm136, %v1394, %v1396
    %v1400 = vsel %vm63, %v1382, 0
    %v1403 = vsel %vm67, %v1397, 0
    %v1406 = vsel %vm67, %v1398, 0
    %1408 = vmatprep.subr.bf16.mxu0 %v1406
    %1409 = vmatpush1.bf16.msra.mxu0 %v1403
    %1410 = vmatprep.subr.bf16.mxu0 0
    %1411 = vmatpush1.bf16.msra.mxu0 0
    %1412 = vmatprep.subr.bf16.mxu0 0
    %1413 = vmatpush1.bf16.msra.mxu0 0
    %1414 = vmatprep.subr.bf16.mxu0 0
    %1415 = vmatpush1.bf16.msra.mxu0 0
    %1416 = vmatprep.subr.bf16.mxu0 0
    %1417 = vmatpush1.bf16.msra.mxu0 0
    %1418 = vmatprep.subr.bf16.mxu0 0
    %1419 = vmatpush1.bf16.msra.mxu0 0
    %1420 = vmatprep.subr.bf16.mxu0 0
    %1421 = vmatpush1.bf16.msra.mxu0 0
    %1422 = vmatprep.subr.bf16.mxu0 0
    %1423 = vmatpush1.bf16.msra.mxu0 0
    %1424 = vmatprep.subr.bf16.mxu0 0
    %1425 = vmatpush1.bf16.msra.mxu0 0
    %1426 = vmatprep.subr.bf16.mxu0 0
    %1427 = vmatpush1.bf16.msra.mxu0 0
    %1428 = vmatprep.subr.bf16.mxu0 0
    %1429 = vmatpush1.bf16.msra.mxu0 0
    %1430 = vmatprep.subr.bf16.mxu0 0
    %1431 = vmatpush1.bf16.msra.mxu0 0
    %1432 = vmatprep.subr.bf16.mxu0 0
    %1433 = vmatpush1.bf16.msra.mxu0 0
    %1434 = vmatprep.subr.bf16.mxu0 0
    %1435 = vmatpush1.bf16.msra.mxu0 0
    %1436 = vmatprep.subr.bf16.mxu0 0
    %1437 = vmatpush1.bf16.msra.mxu0 0
    %1438 = vmatprep.subr.bf16.mxu0 0
    %1439 = vmatpush1.bf16.msra.mxu0 0
    %1440 = vmatprep.mubr.bf16.mxu0 0
    %1441 = vmatmul.mubr.bf16.gmra.mrb[0].mxu0 %v1400
    %v1442 = vpop.f32.mrb[0].mxu0
    %v1443 = vadd.f32 %v1370, %v1442
    %v1444 = vpop.f32.mrb[0].mxu0
    %v1445 = vadd.f32 %v1372, %v1444
    %v1446 = vpop.f32.mrb[0].mxu0
    %v1447 = vadd.f32 %v1374, %v1446
    %v1448 = vpop.f32.mrb[0].mxu0
    %v1449 = vadd.f32 %v1376, %v1448
    %1450 = vdwg.mxu0
    %v1451 = vld [vmem:[%s688] sm:$0xf]
    %v1452 = vld [vmem:[%s688 + $0x4] sm:$0xf]
    %v1455 = vunpack.c.l.b16 %v1451
    %v1456 = vunpack.c.l.b16 %v1452
    %v1457 = vpack.c.b16 %v1456, %v1455
    %v1460 = vunpack.c.l.b16 %v1315
    %v1461 = vunpack.c.h.b16 %v1315
    %v1462 = vunpack.c.l.b16 %v1316
    %v1463 = vpack.c.b16 %v1460, %v1460
    %v1464 = vpack.c.b16 %v1461, %v1461
    %v1465 = vpack.c.b16 %v1462, %v1462
    %1466 = vrot.lane.b32.xlu0 %v1463, 126
    %v1467 = vpop.permute.xlu0 %1466
    %1468 = vrot.lane.b32.xlu0 %v1464, 126
    %v1469 = vpop.permute.xlu0 %1468
    %1470 = vrot.lane.b32.xlu0 %v1465, 126
    %v1471 = vpop.permute.xlu0 %1470
    %v1472 = vsel %vm213, %v1467, %v1469
    %v1473 = vsel %vm213, %v1469, %v1471
    %v1475 = vsel %vm63, %v1457, 0
    %v1478 = vsel %vm67, %v1472, 0
    %v1481 = vsel %vm67, %v1473, 0
    %1483 = vmatprep.subr.bf16.mxu0 %v1481
    %1484 = vmatpush1.bf16.msra.mxu0 %v1478
    %1485 = vmatprep.subr.bf16.mxu0 0
    %1486 = vmatpush1.bf16.msra.mxu0 0
    %1487 = vmatprep.subr.bf16.mxu0 0
    %1488 = vmatpush1.bf16.msra.mxu0 0
    %1489 = vmatprep.subr.bf16.mxu0 0
    %1490 = vmatpush1.bf16.msra.mxu0 0
    %1491 = vmatprep.subr.bf16.mxu0 0
    %1492 = vmatpush1.bf16.msra.mxu0 0
    %1493 = vmatprep.subr.bf16.mxu0 0
    %1494 = vmatpush1.bf16.msra.mxu0 0
    %1495 = vmatprep.subr.bf16.mxu0 0
    %1496 = vmatpush1.bf16.msra.mxu0 0
    %1497 = vmatprep.subr.bf16.mxu0 0
    %1498 = vmatpush1.bf16.msra.mxu0 0
    %1499 = vmatprep.subr.bf16.mxu0 0
    %1500 = vmatpush1.bf16.msra.mxu0 0
    %1501 = vmatprep.subr.bf16.mxu0 0
    %1502 = vmatpush1.bf16.msra.mxu0 0
    %1503 = vmatprep.subr.bf16.mxu0 0
    %1504 = vmatpush1.bf16.msra.mxu0 0
    %1505 = vmatprep.subr.bf16.mxu0 0
    %1506 = vmatpush1.bf16.msra.mxu0 0
    %1507 = vmatprep.subr.bf16.mxu0 0
    %1508 = vmatpush1.bf16.msra.mxu0 0
    %1509 = vmatprep.subr.bf16.mxu0 0
    %1510 = vmatpush1.bf16.msra.mxu0 0
    %1511 = vmatprep.subr.bf16.mxu0 0
    %1512 = vmatpush1.bf16.msra.mxu0 0
    %1513 = vmatprep.subr.bf16.mxu0 0
    %1514 = vmatpush1.bf16.msra.mxu0 0
    %1515 = vmatprep.mubr.bf16.mxu0 0
    %1516 = vmatmul.mubr.bf16.gmra.mrb[0].mxu0 %v1475
    %v1517 = vpop.f32.mrb[0].mxu0
    %v1518 = vadd.f32 0.0, %v1517
    %v1519 = vpop.f32.mrb[0].mxu0
    %v1520 = vadd.f32 0.0, %v1519
    %v1521 = vpop.f32.mrb[0].mxu0
    %v1522 = vadd.f32 0.0, %v1521
    %v1523 = vpop.f32.mrb[0].mxu0
    %v1524 = vadd.f32 0.0, %v1523
    %1525 = vdwg.mxu0
    %v1526 = vadd.f32 %v1443, %v1518
    %v1527 = vadd.f32 %v1445, %v1520
    %v1528 = vadd.f32 %v1447, %v1522
    %v1529 = vadd.f32 %v1449, %v1524
    %v1530 = vld [vmem:[%s8] sm:$0xff]
    %v1531 = vld [vmem:[%s8 + $0x8] sm:$0xff]
    %1533 = vset.pattern.permute.xlu0 0
    %1534 = vperm.xlu0 %1533, %v1530
    %v1535 = vpop.permute.xlu0 %1534
    %1538 = vset.pattern.permute.xlu0 0
    %1539 = vperm.xlu0 %1538, %v1531
    %v1540 = vpop.permute.xlu0 %1539
    %v1542 = vadd.f32 %v1526, %v1535
    %v1543 = vadd.f32 %v1527, %v1535
    %v1544 = vadd.f32 %v1528, %v1540
    %v1545 = vadd.f32 %v1529, %v1540
    %vm1546 = vcmp.gt.f32.partialorder %v1542, 0.0
    %vm1547 = vcmp.gt.f32.partialorder %v1543, 0.0
    %vm1548 = vcmp.gt.f32.partialorder %v1544, 0.0
    %vm1549 = vcmp.gt.f32.partialorder %v1545, 0.0
    %v1550 = vmul.f32 %v1542, 0.2
    %v1551 = vmul.f32 %v1543, 0.2
    %v1552 = vmul.f32 %v1544, 0.2
    %v1553 = vmul.f32 %v1545, 0.2
    %v1554 = vsel %vm1546, %v1542, %v1550
    %v1555 = vsel %vm1547, %v1543, %v1551
    %v1556 = vsel %vm1548, %v1544, %v1552
    %v1557 = vsel %vm1549, %v1545, %v1553
    %v1558 = vld [vmem:[%s1063] sm:$0xff]
    %v1559 = vld [vmem:[%s1063 + $0x8] sm:$0xff]
    %v1560 = vld [vmem:[%s1063 + $0x10] sm:$0xff]
    %v1561 = vld [vmem:[%s1063 + $0x18] sm:$0xff]
    %v1562 = vadd.f32 %v1558, %v1554
    %v1563 = vadd.f32 %v1559, %v1555
    %v1564 = vadd.f32 %v1560, %v1556
    %v1565 = vadd.f32 %v1561, %v1557
    %1566 = vst [vmem:[%s1063] sm:$0xff] %v1562
    %1567 = vst [vmem:[%s1063 + $0x8] sm:$0xff] %v1563
    %1568 = vst [vmem:[%s1063 + $0x10] sm:$0xff] %v1564
    %1569 = vst [vmem:[%s1063 + $0x18] sm:$0xff] %v1565
    // Predicated region
    $region38: #{tpu_custom_call.1} parent=1 // pred_check
      _
    $region39: #{tpu_custom_call.1} parent=1 // pred_check_branch
      %1571 = sbr.rel (0) target = $region41
    $region40: #{tpu_custom_call.1} parent=1 // pred_region
      %s1573 = ssub.s32 1024, 1024
      %1574 = vsyncadd [#allocation5], %s1573
      %s1575 = sshll.u32 [#allocation4], 4
      %s1576 = int_to_ptr.vmem [resolvable:$true] %s1575
      %1581 = dma.vmem_to_hbm [thread:$0]  %s1576, 1024, %s9, [#allocation5], 256, 256, 16
    $region41: #{tpu_custom_call.1} parent=1 // pred_fallthru
      _
    // Predicated region
    $region42: #{tpu_custom_call.1} parent=1 // pred_check
      _
    $region43: #{tpu_custom_call.1} parent=1 // pred_check_branch
      %1583 = sbr.rel (0) target = $region45
    $region44: #{tpu_custom_call.1} parent=1 // pred_region
      %1584 = dma.done [#allocation5], 1024
    $region45: #{tpu_custom_call.1} parent=1 // pred_fallthru
      _
    %1585 = vsyncpa [#allocation5], 1

</llo_original>
